<compile_context>
chip_gen: v5e
topology: v5e:2x2
jax: 0.10.0
libtpu: 0.0.40
codegen_flags: <defaults>
</compile_context>

<pallas_src>
import functools

import jax
import jax.numpy as jnp
from jax import lax
from jax.experimental import pallas as pl
from jax.experimental.pallas import tpu as pltpu

_HIGH = jax.lax.Precision.HIGHEST  # used only by the pure-JAX reference


# ------------------------------ kernel ------------------------------------- #

def _block_c_kernel(x_ref, wqkvT_ref, bqkv_ref, woT_ref, bo_ref,
                    scale_ref, shift_ref, o_ref, qkv_scr, *, heads, dh, tq):
    """Fused BN+ReLU6 -> QKV -> MHA -> out-proj -> residual.

    Layout: channels on sublanes, tokens on lanes.
      x_ref:     (C, S)        raw input for one batch element
      wqkvT_ref: (3D, C)       rows = [Wq^T | Wk^T | Wv^T]
      bqkv_ref:  (3D, 1)
      woT_ref:   (C, D)        Wo^T
      bo_ref:    (C, 1)
      scale/shift: (C, 1)      folded BatchNorm affine
      o_ref:     (C, tq)       output tile (lane-dense, tq >= 128)
      qkv_scr:   (3D, S)       VMEM scratch, full-sequence Q/K/V
    """
    qi = pl.program_id(1)
    D = heads * dh

    # Compute full-sequence QKV once per batch element, keep it in VMEM.
    @pl.when(qi == 0)
    def _():
        x_top = jnp.clip(x_ref[...] * scale_ref[...] + shift_ref[...],
                         0.0, 6.0)                                   # (C, S)
        qkv_scr[...] = (
            jnp.dot(wqkvT_ref[...], x_top,
                    preferred_element_type=jnp.float32)               # (3D, S)
            + bqkv_ref[...])

    q0 = pl.multiple_of(qi * tq, tq)          # lane-aligned query-tile offset
    inv_sqrt = 1.0 / float(dh) ** 0.5

    # Per-head attention (heads stacked on the sublane axis of qkv_scr).
    outs = []
    for h in range(heads):                    # small static head loop
        q_h = qkv_scr[h * dh:(h + 1) * dh, pl.ds(q0, tq)] * inv_sqrt  # (dh, tq)
        k_h = qkv_scr[D + h * dh:D + (h + 1) * dh, :]                 # (dh, S)
        v_h = qkv_scr[2 * D + h * dh:2 * D + (h + 1) * dh, :]         # (dh, S)

        # scores with keys on the sublane axis: s[k, q]
        s = lax.dot_general(k_h, q_h, (((0,), (0,)), ((), ())),
                            preferred_element_type=jnp.float32)       # (S, tq)
        m = jnp.max(s, axis=0, keepdims=True)                         # (1, tq)
        p = jnp.exp(s - m)                                            # (S, tq)
        l = jnp.sum(p, axis=0, keepdims=True)                         # (1, tq)
        o_h = jnp.dot(v_h, p, preferred_element_type=jnp.float32)     # (dh, tq)
        # normalize the small per-head output, not the (S, tq) prob tensor
        outs.append(o_h * pl.reciprocal(l, approx=True))

    o_all = jnp.concatenate(outs, axis=0)                             # (D, tq)

    # Single output projection (K = D) + bias + recomputed BN+ReLU6 residual.
    x_top_q = jnp.clip(
        x_ref[:, pl.ds(q0, tq)] * scale_ref[...] + shift_ref[...], 0.0, 6.0)
    o_ref[...] = (
        jnp.dot(woT_ref[...], o_all, preferred_element_type=jnp.float32)
        + bo_ref[...] + x_top_q)


# --------------------------- pallas wrapper --------------------------------- #

def _q_tile(S):
    for t in (512, 256, 128):
        if S % t == 0:
            return t
    return S


def _vmem_limit_bytes():
    # v7x has 64 MiB physical VMEM vs 128 MiB on v5e/v6e; derive the scoped
    # limit from the chip instead of hard-coding it.
    try:
        return int(pltpu.get_tpu_info().vmem_capacity_bytes * 3 // 4)
    except Exception:
        return None


def _bn_fold(gamma, beta, mean, var, eps=1e-5):
    scale = gamma / jnp.sqrt(var + eps)
    shift = beta - mean * scale
    return scale, shift


def block_c_forward(x_nchw, p, heads):
    N, C, H, W = x_nchw.shape
    S = H * W
    D = p["wq"].shape[-1]
    assert D == C, "residual add in Block_C requires chanOut == chanIn"
    assert D % heads == 0, (D, heads)
    dh = D // heads

    # channels-on-sublane / tokens-on-lane slab; reshape only, no transpose.
    x_cs = x_nchw.reshape(N, C, S)

    scale, shift = _bn_fold(p["gamma"], p["beta"], p["mean"], p["var"])
    # transposed, concatenated projection weights: (3D, C) and (C, D)
    wqkvT = jnp.concatenate([p["wq"].T, p["wk"].T, p["wv"].T], axis=0)
    bqkv = jnp.concatenate([p["bq"], p["bk"], p["bv"]], axis=0).reshape(3 * D, 1)
    woT = p["wo"].T                                                    # (C, D)

    tq = _q_tile(S)
    nq = S // tq
    kern = functools.partial(_block_c_kernel, heads=heads, dh=dh, tq=tq)

    cp_kwargs = dict(dimension_semantics=("parallel", "arbitrary"))
    vl = _vmem_limit_bytes()
    if vl is not None:
        cp_kwargs["vmem_limit_bytes"] = vl

    out_cs = pl.pallas_call(
        kern,
        out_shape=jax.ShapeDtypeStruct((N, C, S), jnp.float32),
        grid=(N, nq),
        in_specs=[
            pl.BlockSpec((None, C, S), lambda n, q: (n, 0, 0)),   # x (per batch)
            pl.BlockSpec((3 * D, C), lambda n, q: (0, 0)),        # Wqkv^T
            pl.BlockSpec((3 * D, 1), lambda n, q: (0, 0)),        # bqkv
            pl.BlockSpec((C, D), lambda n, q: (0, 0)),            # Wo^T
            pl.BlockSpec((C, 1), lambda n, q: (0, 0)),            # bo
            pl.BlockSpec((C, 1), lambda n, q: (0, 0)),            # BN scale
            pl.BlockSpec((C, 1), lambda n, q: (0, 0)),            # BN shift
        ],
        out_specs=pl.BlockSpec((None, C, tq), lambda n, q: (n, 0, q)),
        scratch_shapes=[pltpu.VMEM((3 * D, S), jnp.float32)],
        compiler_params=pltpu.CompilerParams(**cp_kwargs),
    )(x_cs, wqkvT, bqkv, woT, p["bo"].reshape(C, 1),
      scale.reshape(C, 1), shift.reshape(C, 1))

    return out_cs.reshape(N, C, H, W)


# ---------------------- pure-JAX reference (for check) ---------------------- #

def _ref_forward(x_nchw, p, heads):
    N, C, H, W = x_nchw.shape
    S = H * W
    x = jnp.transpose(x_nchw, (0, 2, 3, 1)).reshape(N, S, C)
    scale, shift = _bn_fold(p["gamma"], p["beta"], p["mean"], p["var"])
    xt = jnp.clip(x * scale + shift, 0.0, 6.0)
    D = p["wq"].shape[-1]
    dh = D // heads
    q = jnp.einsum("nsc,cd->nsd", xt, p["wq"], precision=_HIGH) + p["bq"]
    k = jnp.einsum("nsc,cd->nsd", xt, p["wk"], precision=_HIGH) + p["bk"]
    v = jnp.einsum("nsc,cd->nsd", xt, p["wv"], precision=_HIGH) + p["bv"]
    q = q.reshape(N, S, heads, dh).transpose(0, 2, 1, 3)
    k = k.reshape(N, S, heads, dh).transpose(0, 2, 1, 3)
    v = v.reshape(N, S, heads, dh).transpose(0, 2, 1, 3)
    s = jnp.einsum("nhqd,nhkd->nhqk", q, k, precision=_HIGH) / jnp.sqrt(
        jnp.float32(dh))
    a = jax.nn.softmax(s, axis=-1)
    o = jnp.einsum("nhqk,nhkd->nhqd", a, v, precision=_HIGH)
    o = o.transpose(0, 2, 1, 3).reshape(N, S, D)
    att = jnp.einsum("nsd,dc->nsc", o, p["wo"], precision=_HIGH) + p["bo"]
    out = xt + att
    return jnp.transpose(out.reshape(N, H, W, C), (0, 3, 1, 2))


# --------------------------------- main ------------------------------------- #

if __name__ == "__main__":
    # chanIn == chanOut is required by the residual add in Block_C.
    N, C, H, W, heads = 2, 8, 16, 16, 2
    D = C

    key = jax.random.PRNGKey(0)
    ks = jax.random.split(key, 13)
    f32 = jnp.float32

    x = jax.random.normal(ks[0], (N, C, H, W), f32)

    params = dict(
        # BatchNorm2d(chanIn) running stats / affine
        gamma=1.0 + 0.1 * jax.random.normal(ks[1], (C,), f32),
        beta=0.1 * jax.random.normal(ks[2], (C,), f32),
        mean=0.1 * jax.random.normal(ks[3], (C,), f32),
        var=jax.random.uniform(ks[4], (C,), f32, 0.5, 1.5),
        # MultiHeadAttention projections (chanIn -> chanOut)
        wq=0.1 * jax.random.normal(ks[5], (C, D), f32),
        bq=0.1 * jax.random.normal(ks[6], (D,), f32),
        wk=0.1 * jax.random.normal(ks[7], (C, D), f32),
        bk=0.1 * jax.random.normal(ks[8], (D,), f32),
        wv=0.1 * jax.random.normal(ks[9], (C, D), f32),
        bv=0.1 * jax.random.normal(ks[10], (D,), f32),
        # output projection (chanOut -> chanOut == chanIn)
        wo=0.1 * jax.random.normal(ks[11], (D, C), f32),
        bo=0.1 * jax.random.normal(ks[12], (C,), f32),
    )

    out = jax.block_until_ready(block_c_forward(x, params, heads))
    ref = jax.block_until_ready(_ref_forward(x, params, heads))

    assert out.shape == (N, C, H, W), out.shape
    # default (non-HIGHEST) MXU precision + approx reciprocal -> loose tolerance
    assert jnp.allclose(out, ref, atol=2e-2, rtol=2e-2), (
        float(jnp.max(jnp.abs(out - ref))))
    print("KERNEL_OK")
</pallas_src>

<mosaic_0001>
module attributes {stable_mosaic.version = 11 : i64} {
  func.func @_block_c_kernel(%arg0: i32, %arg1: i32, %arg2: memref<1x8x256xf32, #tpu.memory_space<vmem>>, %arg3: memref<24x8xf32, #tpu.memory_space<vmem>>, %arg4: memref<24x1xf32, #tpu.memory_space<vmem>>, %arg5: memref<8x8xf32, #tpu.memory_space<vmem>>, %arg6: memref<8x1xf32, #tpu.memory_space<vmem>>, %arg7: memref<8x1xf32, #tpu.memory_space<vmem>>, %arg8: memref<8x1xf32, #tpu.memory_space<vmem>>, %arg9: memref<1x8x256xf32, #tpu.memory_space<vmem>>, %arg10: memref<24x256xf32, #tpu.memory_space<vmem>>) attributes {dimension_semantics = [#tpu.dimension_semantics<parallel>, #tpu.dimension_semantics<arbitrary>], iteration_bounds = array<i64: 2, 1>, scalar_prefetch = 0 : i64, scratch_operands = 1 : i64, tpu.core_type = #tpu.core_type<tc>, window_params = [{transform_indices = @transform_0, window_bounds = array<i64: 1, 8, 256>}, {pipeline_mode = #tpu.pipeline_mode<synchronous>, transform_indices = @transform_1, window_bounds = array<i64: 24, 8>}, {pipeline_mode = #tpu.pipeline_mode<synchronous>, transform_indices = @transform_2, window_bounds = array<i64: 24, 1>}, {pipeline_mode = #tpu.pipeline_mode<synchronous>, transform_indices = @transform_3, window_bounds = array<i64: 8, 8>}, {pipeline_mode = #tpu.pipeline_mode<synchronous>, transform_indices = @transform_4, window_bounds = array<i64: 8, 1>}, {pipeline_mode = #tpu.pipeline_mode<synchronous>, transform_indices = @transform_5, window_bounds = array<i64: 8, 1>}, {pipeline_mode = #tpu.pipeline_mode<synchronous>, transform_indices = @transform_6, window_bounds = array<i64: 8, 1>}, {transform_indices = @transform_7, window_bounds = array<i64: 1, 8, 256>}]} {
    %c0_i32 = arith.constant 0 : i32
    %0 = arith.cmpi eq, %arg1, %c0_i32 : i32
    %1 = arith.extui %0 : i1 to i32
    %c0_i32_0 = arith.constant 0 : i32
    %2 = arith.cmpi ne, %1, %c0_i32_0 : i32
    scf.if %2 {
      %c0_30 = arith.constant 0 : index
      %c0_31 = arith.constant 0 : index
      %c0_32 = arith.constant 0 : index
      %64 = vector.load %arg2[%c0_30, %c0_31, %c0_32] : memref<1x8x256xf32, #tpu.memory_space<vmem>>, vector<1x8x256xf32>
      %65 = vector.shape_cast %64 : vector<1x8x256xf32> to vector<8x256xf32>
      %c0_33 = arith.constant 0 : index
      %c0_34 = arith.constant 0 : index
      %66 = vector.load %arg7[%c0_33, %c0_34] : memref<8x1xf32, #tpu.memory_space<vmem>>, vector<8x1xf32>
      %67 = vector.broadcast %66 : vector<8x1xf32> to vector<8x256xf32>
      %68 = arith.mulf %65, %67 : vector<8x256xf32>
      %c0_35 = arith.constant 0 : index
      %c0_36 = arith.constant 0 : index
      %69 = vector.load %arg8[%c0_35, %c0_36] : memref<8x1xf32, #tpu.memory_space<vmem>>, vector<8x1xf32>
      %70 = vector.broadcast %69 : vector<8x1xf32> to vector<8x256xf32>
      %71 = arith.addf %68, %70 : vector<8x256xf32>
      %cst_37 = arith.constant 0.000000e+00 : f32
      %cst_38 = arith.constant 6.000000e+00 : f32
      %72 = vector.broadcast %cst_37 : f32 to vector<8x256xf32>
      %73 = arith.maximumf %72, %71 : vector<8x256xf32>
      %74 = vector.broadcast %cst_38 : f32 to vector<8x256xf32>
      %75 = arith.minimumf %74, %73 : vector<8x256xf32>
      %c0_39 = arith.constant 0 : index
      %c0_40 = arith.constant 0 : index
      %76 = vector.load %arg3[%c0_39, %c0_40] : memref<24x8xf32, #tpu.memory_space<vmem>>, vector<24x8xf32>
      %cst_41 = arith.constant dense<0.000000e+00> : vector<24x256xf32>
      %77 = tpu.matmul %76, %75, %cst_41 {dimension_numbers = #tpu.dot_dimension_numbers<[1], [0], [0], [1], [0, 0, 1, 1], [], []>} : vector<24x8xf32>, vector<8x256xf32>, vector<24x256xf32> -> vector<24x256xf32>
      %c0_42 = arith.constant 0 : index
      %c0_43 = arith.constant 0 : index
      %78 = vector.load %arg4[%c0_42, %c0_43] : memref<24x1xf32, #tpu.memory_space<vmem>>, vector<24x1xf32>
      %79 = vector.broadcast %78 : vector<24x1xf32> to vector<24x256xf32>
      %80 = arith.addf %77, %79 : vector<24x256xf32>
      %c0_44 = arith.constant 0 : index
      %c0_45 = arith.constant 0 : index
      %81 = vector.load %arg10[%c0_44, %c0_45] : memref<24x256xf32, #tpu.memory_space<vmem>>, vector<24x256xf32>
      tpu.vector_store %arg10[%c0_44, %c0_45], %80 {strides = array<i32>} : memref<24x256xf32, #tpu.memory_space<vmem>>, vector<24x256xf32>,
    } else {
    }
    %c256_i32 = arith.constant 256 : i32
    %3 = arith.muli %arg1, %c256_i32 : i32
    %4 = tpu.assume_multiple %3, 256 : i32
    %c0 = arith.constant 0 : index
    %5 = arith.index_cast %4 : i32 to index
    %6 = vector.load %arg10[%c0, %5] : memref<24x256xf32, #tpu.memory_space<vmem>>, vector<4x256xf32>
    %cst = arith.constant 5.000000e-01 : f32
    %7 = vector.broadcast %cst : f32 to vector<4x256xf32>
    %8 = arith.mulf %6, %7 : vector<4x256xf32>
    %c8 = arith.constant 8 : index
    %c0_1 = arith.constant 0 : index
    %9 = vector.load %arg10[%c8, %c0_1] : memref<24x256xf32, #tpu.memory_space<vmem>>, vector<4x256xf32>
    %c16 = arith.constant 16 : index
    %c0_2 = arith.constant 0 : index
    %10 = vector.load %arg10[%c16, %c0_2] : memref<24x256xf32, #tpu.memory_space<vmem>>, vector<4x256xf32>
    %cst_3 = arith.constant dense<0.000000e+00> : vector<256x256xf32>
    %11 = tpu.matmul %9, %8, %cst_3 {dimension_numbers = #tpu.dot_dimension_numbers<[0], [0], [1], [1], [0, 1, 1, 1], [], []>} : vector<4x256xf32>, vector<4x256xf32>, vector<256x256xf32> -> vector<256x256xf32>
    %cst_4 = arith.constant dense<0xFF800000> : vector<256xf32>
    %12 = vector.multi_reduction <maximumf>, %11, %cst_4 [0] : vector<256x256xf32> to vector<256xf32>
    %13 = vector.shape_cast %12 : vector<256xf32> to vector<1x256xf32>
    %14 = vector.broadcast %13 : vector<1x256xf32> to vector<256x256xf32>
    %15 = arith.subf %11, %14 : vector<256x256xf32>
    %16 = math.exp %15 : vector<256x256xf32>
    %cst_5 = arith.constant dense<0.000000e+00> : vector<256xf32>
    %17 = vector.multi_reduction <add>, %16, %cst_5 [0] : vector<256x256xf32> to vector<256xf32>
    %18 = vector.shape_cast %17 : vector<256xf32> to vector<1x256xf32>
    %cst_6 = arith.constant dense<0.000000e+00> : vector<4x256xf32>
    %19 = tpu.matmul %10, %16, %cst_6 {dimension_numbers = #tpu.dot_dimension_numbers<[1], [0], [0], [1], [0, 0, 1, 1], [], []>} : vector<4x256xf32>, vector<256x256xf32>, vector<4x256xf32> -> vector<4x256xf32>
    %20 = tpu.reciprocal %18 {approx = true} : vector<1x256xf32> -> vector<1x256xf32>
    %21 = vector.broadcast %20 : vector<1x256xf32> to vector<4x256xf32>
    %22 = arith.mulf %19, %21 : vector<4x256xf32>
    %c4 = arith.constant 4 : index
    %23 = arith.index_cast %4 : i32 to index
    %24 = vector.load %arg10[%c4, %23] : memref<24x256xf32, #tpu.memory_space<vmem>>, vector<4x256xf32>
    %cst_7 = arith.constant 5.000000e-01 : f32
    %25 = vector.broadcast %cst_7 : f32 to vector<4x256xf32>
    %26 = arith.mulf %24, %25 : vector<4x256xf32>
    %c12 = arith.constant 12 : index
    %c0_8 = arith.constant 0 : index
    %27 = vector.load %arg10[%c12, %c0_8] : memref<24x256xf32, #tpu.memory_space<vmem>>, vector<4x256xf32>
    %c20 = arith.constant 20 : index
    %c0_9 = arith.constant 0 : index
    %28 = vector.load %arg10[%c20, %c0_9] : memref<24x256xf32, #tpu.memory_space<vmem>>, vector<4x256xf32>
    %cst_10 = arith.constant dense<0.000000e+00> : vector<256x256xf32>
    %29 = tpu.matmul %27, %26, %cst_10 {dimension_numbers = #tpu.dot_dimension_numbers<[0], [0], [1], [1], [0, 1, 1, 1], [], []>} : vector<4x256xf32>, vector<4x256xf32>, vector<256x256xf32> -> vector<256x256xf32>
    %cst_11 = arith.constant dense<0xFF800000> : vector<256xf32>
    %30 = vector.multi_reduction <maximumf>, %29, %cst_11 [0] : vector<256x256xf32> to vector<256xf32>
    %31 = vector.shape_cast %30 : vector<256xf32> to vector<1x256xf32>
    %32 = vector.broadcast %31 : vector<1x256xf32> to vector<256x256xf32>
    %33 = arith.subf %29, %32 : vector<256x256xf32>
    %34 = math.exp %33 : vector<256x256xf32>
    %cst_12 = arith.constant dense<0.000000e+00> : vector<256xf32>
    %35 = vector.multi_reduction <add>, %34, %cst_12 [0] : vector<256x256xf32> to vector<256xf32>
    %36 = vector.shape_cast %35 : vector<256xf32> to vector<1x256xf32>
    %cst_13 = arith.constant dense<0.000000e+00> : vector<4x256xf32>
    %37 = tpu.matmul %28, %34, %cst_13 {dimension_numbers = #tpu.dot_dimension_numbers<[1], [0], [0], [1], [0, 0, 1, 1], [], []>} : vector<4x256xf32>, vector<256x256xf32>, vector<4x256xf32> -> vector<4x256xf32>
    %38 = tpu.reciprocal %36 {approx = true} : vector<1x256xf32> -> vector<1x256xf32>
    %39 = vector.broadcast %38 : vector<1x256xf32> to vector<4x256xf32>
    %40 = arith.mulf %37, %39 : vector<4x256xf32>
    %41 = tpu.concatenate %22, %40 in 0 : vector<4x256xf32>, vector<4x256xf32> -> vector<8x256xf32>
    %c0_14 = arith.constant 0 : index
    %c0_15 = arith.constant 0 : index
    %42 = arith.index_cast %4 : i32 to index
    %43 = vector.load %arg2[%c0_14, %c0_15, %42] : memref<1x8x256xf32, #tpu.memory_space<vmem>>, vector<1x8x256xf32>
    %44 = vector.shape_cast %43 : vector<1x8x256xf32> to vector<8x256xf32>
    %c0_16 = arith.constant 0 : index
    %c0_17 = arith.constant 0 : index
    %45 = vector.load %arg7[%c0_16, %c0_17] : memref<8x1xf32, #tpu.memory_space<vmem>>, vector<8x1xf32>
    %46 = vector.broadcast %45 : vector<8x1xf32> to vector<8x256xf32>
    %47 = arith.mulf %44, %46 : vector<8x256xf32>
    %c0_18 = arith.constant 0 : index
    %c0_19 = arith.constant 0 : index
    %48 = vector.load %arg8[%c0_18, %c0_19] : memref<8x1xf32, #tpu.memory_space<vmem>>, vector<8x1xf32>
    %49 = vector.broadcast %48 : vector<8x1xf32> to vector<8x256xf32>
    %50 = arith.addf %47, %49 : vector<8x256xf32>
    %cst_20 = arith.constant 0.000000e+00 : f32
    %cst_21 = arith.constant 6.000000e+00 : f32
    %51 = vector.broadcast %cst_20 : f32 to vector<8x256xf32>
    %52 = arith.maximumf %51, %50 : vector<8x256xf32>
    %53 = vector.broadcast %cst_21 : f32 to vector<8x256xf32>
    %54 = arith.minimumf %53, %52 : vector<8x256xf32>
    %c0_22 = arith.constant 0 : index
    %c0_23 = arith.constant 0 : index
    %55 = vector.load %arg5[%c0_22, %c0_23] : memref<8x8xf32, #tpu.memory_space<vmem>>, vector<8x8xf32>
    %cst_24 = arith.constant dense<0.000000e+00> : vector<8x256xf32>
    %56 = tpu.matmul %55, %41, %cst_24 {dimension_numbers = #tpu.dot_dimension_numbers<[1], [0], [0], [1], [0, 0, 1, 1], [], []>} : vector<8x8xf32>, vector<8x256xf32>, vector<8x256xf32> -> vector<8x256xf32>
    %c0_25 = arith.constant 0 : index
    %c0_26 = arith.constant 0 : index
    %57 = vector.load %arg6[%c0_25, %c0_26] : memref<8x1xf32, #tpu.memory_space<vmem>>, vector<8x1xf32>
    %58 = vector.broadcast %57 : vector<8x1xf32> to vector<8x256xf32>
    %59 = arith.addf %56, %58 : vector<8x256xf32>
    %60 = arith.addf %59, %54 : vector<8x256xf32>
    %c0_27 = arith.constant 0 : index
    %c0_28 = arith.constant 0 : index
    %c0_29 = arith.constant 0 : index
    %61 = vector.load %arg9[%c0_27, %c0_28, %c0_29] : memref<1x8x256xf32, #tpu.memory_space<vmem>>, vector<1x8x256xf32>
    %62 = vector.shape_cast %61 : vector<1x8x256xf32> to vector<8x256xf32>
    %63 = vector.shape_cast %60 : vector<8x256xf32> to vector<1x8x256xf32>
    tpu.vector_store %arg9[%c0_27, %c0_28, %c0_29], %63 {strides = array<i32>} : memref<1x8x256xf32, #tpu.memory_space<vmem>>, vector<1x8x256xf32>,
    return
  }
  func.func @transform_0(%arg0: i32, %arg1: i32) -> (i32, i32, i32) {
    %c0_i32 = arith.constant 0 : i32
    %c0_i32_0 = arith.constant 0 : i32
    %c0_i32_1 = arith.constant 0 : i32
    return %arg0, %c0_i32, %c0_i32_0 : i32, i32, i32
  }
  func.func @transform_1(%arg0: i32, %arg1: i32) -> (i32, i32) {
    %c0_i32 = arith.constant 0 : i32
    %c0_i32_0 = arith.constant 0 : i32
    %c0_i32_1 = arith.constant 0 : i32
    return %c0_i32, %c0_i32_0 : i32, i32
  }
  func.func @transform_2(%arg0: i32, %arg1: i32) -> (i32, i32) {
    %c0_i32 = arith.constant 0 : i32
    %c0_i32_0 = arith.constant 0 : i32
    %c0_i32_1 = arith.constant 0 : i32
    return %c0_i32, %c0_i32_0 : i32, i32
  }
  func.func @transform_3(%arg0: i32, %arg1: i32) -> (i32, i32) {
    %c0_i32 = arith.constant 0 : i32
    %c0_i32_0 = arith.constant 0 : i32
    %c0_i32_1 = arith.constant 0 : i32
    return %c0_i32, %c0_i32_0 : i32, i32
  }
  func.func @transform_4(%arg0: i32, %arg1: i32) -> (i32, i32) {
    %c0_i32 = arith.constant 0 : i32
    %c0_i32_0 = arith.constant 0 : i32
    %c0_i32_1 = arith.constant 0 : i32
    return %c0_i32, %c0_i32_0 : i32, i32
  }
  func.func @transform_5(%arg0: i32, %arg1: i32) -> (i32, i32) {
    %c0_i32 = arith.constant 0 : i32
    %c0_i32_0 = arith.constant 0 : i32
    %c0_i32_1 = arith.constant 0 : i32
    return %c0_i32, %c0_i32_0 : i32, i32
  }
  func.func @transform_6(%arg0: i32, %arg1: i32) -> (i32, i32) {
    %c0_i32 = arith.constant 0 : i32
    %c0_i32_0 = arith.constant 0 : i32
    %c0_i32_1 = arith.constant 0 : i32
    return %c0_i32, %c0_i32_0 : i32, i32
  }
  func.func @transform_7(%arg0: i32, %arg1: i32) -> (i32, i32, i32) {
    %c0_i32 = arith.constant 0 : i32
    %c0_i32_0 = arith.constant 0 : i32
    return %arg0, %c0_i32, %arg1 : i32, i32, i32
  }
}

</mosaic_0001>

<llo_original>
// kernel: tpu_custom_call.1
$region0: #{tpu_custom_call.1}
  #allocation0 [shape = 'u32[]', space=smem, size = 0x4, offset = 0x4, fixed_abs, tag = 'smem constant byte address 0x4 - core index']
  #allocation1 [shape = 'u32[72,128]{1,0:T(1,128)}', space=vmem, size = 0x9000, scoped, tag = 'internal scratch']
  #allocation2 [shape = 'f32[24,256]{1,0:T(8,128)}', space=vmem, size = 0x6000, scoped, tag = 'scratch operand']
  %s0 = inlined_call_operand.vmem [shape: f32[2,8,256], index: 0, kind: input, shape index: {}]
  %s1 = inlined_call_operand.vmem [shape: f32[24,8], index: 1, kind: input, shape index: {}]
  %s2 = inlined_call_operand.vmem [shape: f32[24,1], index: 2, kind: input, shape index: {}]
  %s3 = inlined_call_operand.vmem [shape: f32[8,8], index: 3, kind: input, shape index: {}]
  %s4 = inlined_call_operand.vmem [shape: f32[8,1], index: 4, kind: input, shape index: {}]
  %s5 = inlined_call_operand.vmem [shape: f32[8,1], index: 5, kind: input, shape index: {}]
  %s6 = inlined_call_operand.vmem [shape: f32[8,1], index: 6, kind: input, shape index: {}]
  %s7 = inlined_call_operand.hbm [shape: f32[2,8,256], index: 7, kind: output, shape index: {}]
  %s8 = sld [smem:[#allocation0]]
  $region65: #{tpu_custom_call.1} parent=0
    _
  %s10 = ssub.s32 1, %s8
  %s11 = scalar_select 0, %s10, %s8
  $region1: #{tpu_custom_call.1} parent=0
    #allocation3 [shape = 'u8[16384]{0}', space=vmem, size = 0x4000, scoped, tag = 'output window, operand 0']
    #allocation4 [shape = 's32[2]{0}', space=sflag, size = 0x8, scoped, tag = 'scoped memory for tpu_custom_call.1']
    %12 = vsyncpa [#allocation4], 0
    %s13 = scalar_lea.sflag [#allocation4], 1
    %14 = vsyncpa %s13, 0
    loop: start=0, step=1, limit=4
    $region2: #{tpu_custom_call.1} parent=1 // loop_pre_header
      _
    $region3: #{tpu_custom_call.1} parent=1 // loop_header
      %s16 = sphi 0, %s20
      %p17 = scmp.ge.s32.totalorder %s16, 4
      %s23 = sphi 0, %s35
      %s24 = sphi 0, %s31
      %s25 = sphi 0, %s23
      %s26 = sphi 0, %s24
      %s27 = sphi 0, %s25
      %s28 = sphi 0, %s26
      %s38 = sphi 0, %s40
      %s41 = sphi 0, %s38
      %s42 = sphi 0, %s41
      %s58 = sphi 0, %s42
      %s62 = sphi 0, %s62
      %s64 = sphi 0, %s62
      %s65 = sphi 0, %s64
      %s79 = sphi 0, %s65
      %s83 = sphi 0, %s83
      %s85 = sphi 0, %s83
      %s86 = sphi 0, %s85
      %s100 = sphi 0, %s86
      %s104 = sphi 0, %s104
      %s106 = sphi 0, %s104
      %s107 = sphi 0, %s106
      %s121 = sphi 0, %s107
      %s125 = sphi 0, %s125
      %s127 = sphi 0, %s125
      %s128 = sphi 0, %s127
      %s142 = sphi 0, %s128
      %s146 = sphi 0, %s146
      %s148 = sphi 0, %s146
      %s149 = sphi 0, %s148
      %s163 = sphi 0, %s149
      %s167 = sphi 0, %s167
      %s169 = sphi 0, %s167
      %s170 = sphi 0, %s169
      %s184 = sphi 0, %s170
      %s192 = sphi 0, %s194
      %s195 = sphi 0, %s192
      %s196 = sphi 0, %s195
      %s212 = sphi 0, %s196
    $region4: #{tpu_custom_call.1} parent=1 // loop_header_branch
      %19 = sbr.rel (%p17) target = $region8
    $region5: #{tpu_custom_call.1} parent=1 // loop_body
      %s21 = ssub.s32 %s16, 1
      %s22 = ssub.s32 %s16, 2
      %s29 = sadd.s32 1, %s24
      %p30 = scmp.ge.s32.totalorder %s29, 1
      %s31 = scalar_select %p30, 0, %s29
      %s32 = sadd.s32 1, %s23
      %s33 = scalar_select %p30, %s32, %s23
      %p34 = scmp.ge.s32.totalorder %s33, 2
      %s35 = scalar_select %p34, 0, %s33
      %s36 = ssub.s32 %s23, %s35
      %p37 = scmp.eq.s32.totalorder %s36, 0
      %s39 = sadd.s32 %s38, 1
      %s40 = scalar_select %p37, %s38, %s39
      %p43 = pneg %p37
      %p44 = scmp.eq.s32.totalorder %s16, 1
      %p45 = por %p43, %p44
      %p46 = scmp.ne.s32.totalorder %s38, %s41
      %p47 = scmp.eq.s32.totalorder %s16, 0
      %p48 = por %p46, %p47
      %p49 = scmp.ne.s32.totalorder %s38, %s41
      %p50 = scmp.eq.s32.totalorder %s21, 1
      %p51 = por %p49, %p50
      %p52 = scmp.ne.s32.totalorder %s41, %s42
      %p53 = scmp.eq.s32.totalorder %s21, 0
      %p54 = por %p52, %p53
      %p55 = scmp.ne.s32.totalorder %s41, %s42
      %p56 = scmp.eq.s32.totalorder %s22, 1
      %p57 = por %p55, %p56
      %p59 = scmp.ne.s32.totalorder %s42, %s58
      %p60 = scmp.eq.s32.totalorder %s22, 0
      %p61 = por %p59, %p60
      %s63 = sadd.s32 %s62, 1
      %p66 = scmp.eq.s32.totalorder %s16, 1
      %p67 = scmp.ne.s32.totalorder %s62, %s64
      %p68 = scmp.eq.s32.totalorder %s16, 0
      %p69 = por %p67, %p68
      %p70 = scmp.ne.s32.totalorder %s62, %s64
      %p71 = scmp.eq.s32.totalorder %s21, 1
      %p72 = por %p70, %p71
      %p73 = scmp.ne.s32.totalorder %s64, %s65
      %p74 = scmp.eq.s32.totalorder %s21, 0
      %p75 = por %p73, %p74
      %p76 = scmp.ne.s32.totalorder %s64, %s65
      %p77 = scmp.eq.s32.totalorder %s22, 1
      %p78 = por %p76, %p77
      %p80 = scmp.ne.s32.totalorder %s65, %s79
      %p81 = scmp.eq.s32.totalorder %s22, 0
      %p82 = por %p80, %p81
      %s84 = sadd.s32 %s83, 1
      %p87 = scmp.eq.s32.totalorder %s16, 1
      %p88 = scmp.ne.s32.totalorder %s83, %s85
      %p89 = scmp.eq.s32.totalorder %s16, 0
      %p90 = por %p88, %p89
      %p91 = scmp.ne.s32.totalorder %s83, %s85
      %p92 = scmp.eq.s32.totalorder %s21, 1
      %p93 = por %p91, %p92
      %p94 = scmp.ne.s32.totalorder %s85, %s86
      %p95 = scmp.eq.s32.totalorder %s21, 0
      %p96 = por %p94, %p95
      %p97 = scmp.ne.s32.totalorder %s85, %s86
      %p98 = scmp.eq.s32.totalorder %s22, 1
      %p99 = por %p97, %p98
      %p101 = scmp.ne.s32.totalorder %s86, %s100
      %p102 = scmp.eq.s32.totalorder %s22, 0
      %p103 = por %p101, %p102
      %s105 = sadd.s32 %s104, 1
      %p108 = scmp.eq.s32.totalorder %s16, 1
      %p109 = scmp.ne.s32.totalorder %s104, %s106
      %p110 = scmp.eq.s32.totalorder %s16, 0
      %p111 = por %p109, %p110
      %p112 = scmp.ne.s32.totalorder %s104, %s106
      %p113 = scmp.eq.s32.totalorder %s21, 1
      %p114 = por %p112, %p113
      %p115 = scmp.ne.s32.totalorder %s106, %s107
      %p116 = scmp.eq.s32.totalorder %s21, 0
      %p117 = por %p115, %p116
      %p118 = scmp.ne.s32.totalorder %s106, %s107
      %p119 = scmp.eq.s32.totalorder %s22, 1
      %p120 = por %p118, %p119
      %p122 = scmp.ne.s32.totalorder %s107, %s121
      %p123 = scmp.eq.s32.totalorder %s22, 0
      %p124 = por %p122, %p123
      %s126 = sadd.s32 %s125, 1
      %p129 = scmp.eq.s32.totalorder %s16, 1
      %p130 = scmp.ne.s32.totalorder %s125, %s127
      %p131 = scmp.eq.s32.totalorder %s16, 0
      %p132 = por %p130, %p131
      %p133 = scmp.ne.s32.totalorder %s125, %s127
      %p134 = scmp.eq.s32.totalorder %s21, 1
      %p135 = por %p133, %p134
      %p136 = scmp.ne.s32.totalorder %s127, %s128
      %p137 = scmp.eq.s32.totalorder %s21, 0
      %p138 = por %p136, %p137
      %p139 = scmp.ne.s32.totalorder %s127, %s128
      %p140 = scmp.eq.s32.totalorder %s22, 1
      %p141 = por %p139, %p140
      %p143 = scmp.ne.s32.totalorder %s128, %s142
      %p144 = scmp.eq.s32.totalorder %s22, 0
      %p145 = por %p143, %p144
      %s147 = sadd.s32 %s146, 1
      %p150 = scmp.eq.s32.totalorder %s16, 1
      %p151 = scmp.ne.s32.totalorder %s146, %s148
      %p152 = scmp.eq.s32.totalorder %s16, 0
      %p153 = por %p151, %p152
      %p154 = scmp.ne.s32.totalorder %s146, %s148
      %p155 = scmp.eq.s32.totalorder %s21, 1
      %p156 = por %p154, %p155
      %p157 = scmp.ne.s32.totalorder %s148, %s149
      %p158 = scmp.eq.s32.totalorder %s21, 0
      %p159 = por %p157, %p158
      %p160 = scmp.ne.s32.totalorder %s148, %s149
      %p161 = scmp.eq.s32.totalorder %s22, 1
      %p162 = por %p160, %p161
      %p164 = scmp.ne.s32.totalorder %s149, %s163
      %p165 = scmp.eq.s32.totalorder %s22, 0
      %p166 = por %p164, %p165
      %s168 = sadd.s32 %s167, 1
      %p171 = scmp.eq.s32.totalorder %s16, 1
      %p172 = scmp.ne.s32.totalorder %s167, %s169
      %p173 = scmp.eq.s32.totalorder %s16, 0
      %p174 = por %p172, %p173
      %p175 = scmp.ne.s32.totalorder %s167, %s169
      %p176 = scmp.eq.s32.totalorder %s21, 1
      %p177 = por %p175, %p176
      %p178 = scmp.ne.s32.totalorder %s169, %s170
      %p179 = scmp.eq.s32.totalorder %s21, 0
      %p180 = por %p178, %p179
      %p181 = scmp.ne.s32.totalorder %s169, %s170
      %p182 = scmp.eq.s32.totalorder %s22, 1
      %p183 = por %p181, %p182
      %p185 = scmp.ne.s32.totalorder %s170, %s184
      %p186 = scmp.eq.s32.totalorder %s22, 0
      %p187 = por %p185, %p186
      %s188 = ssub.s32 %s23, %s35
      %s189 = ssub.s32 %s24, %s31
      %s190 = sor.u32 %s188, %s189
      %p191 = scmp.eq.s32.totalorder %s190, 0
      %s193 = sadd.s32 %s192, 1
      %s194 = scalar_select %p191, %s192, %s193
      %p197 = pneg %p191
      %p198 = scmp.eq.s32.totalorder %s16, 1
      %p199 = por %p197, %p198
      %p200 = scmp.ne.s32.totalorder %s192, %s195
      %p201 = scmp.eq.s32.totalorder %s16, 0
      %p202 = por %p200, %p201
      %p203 = scmp.ne.s32.totalorder %s192, %s195
      %p204 = scmp.eq.s32.totalorder %s21, 1
      %p205 = por %p203, %p204
      %p206 = scmp.ne.s32.totalorder %s195, %s196
      %p207 = scmp.eq.s32.totalorder %s21, 0
      %p208 = por %p206, %p207
      %p209 = scmp.ne.s32.totalorder %s195, %s196
      %p210 = scmp.eq.s32.totalorder %s22, 1
      %p211 = por %p209, %p210
      %p213 = scmp.ne.s32.totalorder %s196, %s212
      %p214 = scmp.eq.s32.totalorder %s22, 0
      %p215 = por %p213, %p214
      %p216 = scmp.le.s32.totalorder 1, %s16
      %p217 = scmp.lt.s32.totalorder %s16, 3
      %p218 = pnand %p216, %p217
      %p219 = pneg %p218
      // Predicated region
      $region9: #{tpu_custom_call.1} parent=5 // pred_check
        _
      $region10: #{tpu_custom_call.1} parent=5 // pred_check_branch
        %221 = sbr.rel (%p218) target = $region12
      $region11: #{tpu_custom_call.1} parent=5 // pred_region
        %s222 = ssub.s32 %s16, 1
        // Predicated region
        $region13: #{tpu_custom_call.1} parent=11 // pred_check
          %p223 = pneg %p75
        $region14: #{tpu_custom_call.1} parent=11 // pred_check_branch
          %225 = sbr.rel (%p223) target = $region16
        $region15: #{tpu_custom_call.1} parent=11 // pred_region
          _
        $region16: #{tpu_custom_call.1} parent=11 // pred_fallthru
          _
        // Predicated region
        $region17: #{tpu_custom_call.1} parent=11 // pred_check
          %p226 = pneg %p96
        $region18: #{tpu_custom_call.1} parent=11 // pred_check_branch
          %228 = sbr.rel (%p226) target = $region20
        $region19: #{tpu_custom_call.1} parent=11 // pred_region
          _
        $region20: #{tpu_custom_call.1} parent=11 // pred_fallthru
          _
        // Predicated region
        $region21: #{tpu_custom_call.1} parent=11 // pred_check
          %p229 = pneg %p117
        $region22: #{tpu_custom_call.1} parent=11 // pred_check_branch
          %231 = sbr.rel (%p229) target = $region24
        $region23: #{tpu_custom_call.1} parent=11 // pred_region
          _
        $region24: #{tpu_custom_call.1} parent=11 // pred_fallthru
          _
        // Predicated region
        $region25: #{tpu_custom_call.1} parent=11 // pred_check
          %p232 = pneg %p138
        $region26: #{tpu_custom_call.1} parent=11 // pred_check_branch
          %234 = sbr.rel (%p232) target = $region28
        $region27: #{tpu_custom_call.1} parent=11 // pred_region
          _
        $region28: #{tpu_custom_call.1} parent=11 // pred_fallthru
          _
        // Predicated region
        $region29: #{tpu_custom_call.1} parent=11 // pred_check
          %p235 = pneg %p159
        $region30: #{tpu_custom_call.1} parent=11 // pred_check_branch
          %237 = sbr.rel (%p235) target = $region32
        $region31: #{tpu_custom_call.1} parent=11 // pred_region
          _
        $region32: #{tpu_custom_call.1} parent=11 // pred_fallthru
          _
        // Predicated region
        $region33: #{tpu_custom_call.1} parent=11 // pred_check
          %p238 = pneg %p180
        $region34: #{tpu_custom_call.1} parent=11 // pred_check_branch
          %240 = sbr.rel (%p238) target = $region36
        $region35: #{tpu_custom_call.1} parent=11 // pred_region
          _
        $region36: #{tpu_custom_call.1} parent=11 // pred_fallthru
          _
      $region12: #{tpu_custom_call.1} parent=5 // pred_fallthru
        _
      %p241 = scmp.lt.s32.totalorder %s16, 2
      // Predicated region
      $region37: #{tpu_custom_call.1} parent=5 // pred_check
        %p242 = pneg %p241
      $region38: #{tpu_custom_call.1} parent=5 // pred_check_branch
        %244 = sbr.rel (%p242) target = $region40
      $region39: #{tpu_custom_call.1} parent=5 // pred_region
        // Predicated region
        $region41: #{tpu_custom_call.1} parent=39 // pred_check
          %p245 = pneg %p48
        $region42: #{tpu_custom_call.1} parent=39 // pred_check_branch
          %247 = sbr.rel (%p245) target = $region44
        $region43: #{tpu_custom_call.1} parent=39 // pred_region
          %p248 = scmp.lt.s32.totalorder %s23, 1
          %s249 = scalar_select %p248, %s23, 1
          %s250 = smul.addr %s249, 2
          %s251 = smul.addr %s250, 8
          %s252 = scalar_lea.vmem %s0, %s251
        $region44: #{tpu_custom_call.1} parent=39 // pred_fallthru
          _
      $region40: #{tpu_custom_call.1} parent=5 // pred_fallthru
        _
      %p253 = scmp.le.s32.totalorder 1, %s16
      %p254 = scmp.lt.s32.totalorder %s16, 3
      %p255 = pnand %p253, %p254
      %p256 = pneg %p255
      // Predicated region
      $region45: #{tpu_custom_call.1} parent=5 // pred_check
        _
      $region46: #{tpu_custom_call.1} parent=5 // pred_check_branch
        %258 = sbr.rel (%p255) target = $region48
      $region47: #{tpu_custom_call.1} parent=5 // pred_region
        %s259 = ssub.s32 %s16, 1
        %p260 = scmp.lt.s32.totalorder %s25, 1
        %s261 = scalar_select %p260, %s25, 1
        %s262 = smul.addr %s261, 2
        %s263 = smul.addr %s262, 8
        %s264 = scalar_lea.vmem %s0, %s263
        %p265 = pneg %p54
        %p266 = pneg %p51
        %p267 = pneg %p75
        %p268 = pneg %p72
        %p269 = pneg %p96
        %p270 = pneg %p93
        %p271 = pneg %p117
        %p272 = pneg %p114
        %p273 = pneg %p138
        %p274 = pneg %p135
        %p275 = pneg %p159
        %p276 = pneg %p156
        %p277 = pneg %p180
        %p278 = pneg %p177
        %p279 = pneg %p208
        %p280 = pneg %p205
        %s281 = sand.u32 %s195, 1
        %s282 = scalar_lea.sflag [#allocation4], %s281
        %s283 = sand.u32 %s195, 1
        %s284 = smul.addr %s283, 16
        %s285 = scalar_lea.vmem [#allocation3], %s284
        %p286 = scmp.lt.s32.totalorder %s25, 1
        %s287 = scalar_select %p286, %s25, 1
        %s288 = smul.addr %s287, 2
        %s289 = smul.addr %s288, 8
        %s290 = scalar_lea.vmem %s0, %s289
        %s291 = smul.u32 2, %s26
        %p292 = scmp.eq.s32.totalorder %s26, 0
        // Predicated region
        $region49: #{tpu_custom_call.1} parent=47 // pred_check
          %p293 = pneg %p292
        $region50: #{tpu_custom_call.1} parent=47 // pred_check_branch
          %295 = sbr.rel (%p293) target = $region52
        $region51: #{tpu_custom_call.1} parent=47 // pred_region
          %v296 = vld [vmem:[%s290] sm:$0xff]
          %v297 = vld [vmem:[%s290 + $0x8] sm:$0xff]
          %v298 = vld [vmem:[%s5] sm:$0xff]
          %300 = vset.pattern.permute.xlu0 0
          %301 = vperm.xlu0 %300, %v298
          %v302 = vpop.permute.xlu0 %301
          %v304 = vmul.f32 %v296, %v302
          %v305 = vmul.f32 %v297, %v302
          %v306 = vld [vmem:[%s6] sm:$0xff]
          %308 = vset.pattern.permute.xlu0 0
          %309 = vperm.xlu0 %308, %v306
          %v310 = vpop.permute.xlu0 %309
          %v312 = vadd.f32 %v304, %v310
          %v313 = vadd.f32 %v305, %v310
          %v314 = vmax.f32 %v312, 0.0
          %v315 = vmax.f32 %v313, 0.0
          %v316 = vmin.f32 %v314, 6.0
          %v317 = vmin.f32 %v315, 6.0
          %v318 = vld [vmem:[%s1] sm:$0xff]
          %v319 = vld [vmem:[%s1 + $0x8] sm:$0xff]
          %v320 = vld [vmem:[%s1 + $0x10] sm:$0xff]
          %v321 = vld [vmem:[%s2] sm:$0xff]
          %v322 = vld [vmem:[%s2 + $0x8] sm:$0xff]
          %v323 = vld [vmem:[%s2 + $0x10] sm:$0xff]
          %325 = vset.pattern.permute.xlu0 0
          %326 = vperm.xlu0 %325, %v321
          %v327 = vpop.permute.xlu0 %326
          %330 = vset.pattern.permute.xlu0 0
          %331 = vperm.xlu0 %330, %v322
          %v332 = vpop.permute.xlu0 %331
          %335 = vset.pattern.permute.xlu0 0
          %336 = vperm.xlu0 %335, %v323
          %v337 = vpop.permute.xlu0 %336
          %vm339 = vcmask 64512
          %v341 = vsel %vm339, %v318, 0
          %v344 = vsel %vm339, %v319, 0
          %v347 = vsel %vm339, %v320, 0
          %349 = vmatpush.msra.mxu0 0.0
          %350 = vmatpush.msra.mxu0 0.0
          %351 = vmatpush.msra.mxu0 0.0
          %352 = vmatpush.msra.mxu0 0.0
          %353 = vmatpush.msra.mxu0 0.0
          %354 = vmatpush.msra.mxu0 0.0
          %355 = vmatpush.msra.mxu0 0.0
          %356 = vmatpush.msra.mxu0 0.0
          %357 = vmatpush.msra.mxu0 0.0
          %358 = vmatpush.msra.mxu0 0.0
          %359 = vmatpush.msra.mxu0 0.0
          %360 = vmatpush.msra.mxu0 0.0
          %361 = vmatpush.msra.mxu0 0.0
          %362 = vmatpush.msra.mxu0 0.0
          %363 = vmatpush.msra.mxu0 0.0
          %364 = vmatpush.msra.mxu0 %v316
          %365 = vmatmul.f32.gmra.mxu0 %v341
          %v366 = vpop.f32.mrf.mxu0
          %v367 = vadd.f32 %v327, %v366
          %368 = vmatmul.f32.gmra.mxu0 %v344
          %v369 = vpop.f32.mrf.mxu0
          %v370 = vadd.f32 %v332, %v369
          %371 = vmatmul.f32.gmra.mxu0 %v347
          %v372 = vpop.f32.mrf.mxu0
          %v373 = vadd.f32 %v337, %v372
          %374 = vdwg.mxu0
          %375 = vmatpush.msra.mxu0 0.0
          %376 = vmatpush.msra.mxu0 0.0
          %377 = vmatpush.msra.mxu0 0.0
          %378 = vmatpush.msra.mxu0 0.0
          %379 = vmatpush.msra.mxu0 0.0
          %380 = vmatpush.msra.mxu0 0.0
          %381 = vmatpush.msra.mxu0 0.0
          %382 = vmatpush.msra.mxu0 0.0
          %383 = vmatpush.msra.mxu0 0.0
          %384 = vmatpush.msra.mxu0 0.0
          %385 = vmatpush.msra.mxu0 0.0
          %386 = vmatpush.msra.mxu0 0.0
          %387 = vmatpush.msra.mxu0 0.0
          %388 = vmatpush.msra.mxu0 0.0
          %389 = vmatpush.msra.mxu0 0.0
          %390 = vmatpush.msra.mxu0 %v317
          %391 = vmatmul.f32.gmra.mxu0 %v341
          %v392 = vpop.f32.mrf.mxu0
          %v393 = vadd.f32 %v327, %v392
          %394 = vmatmul.f32.gmra.mxu0 %v344
          %v395 = vpop.f32.mrf.mxu0
          %v396 = vadd.f32 %v332, %v395
          %397 = vmatmul.f32.gmra.mxu0 %v347
          %v398 = vpop.f32.mrf.mxu0
          %v399 = vadd.f32 %v337, %v398
          %400 = vdwg.mxu0
          %401 = vst [vmem:[#allocation2] sm:$0xff] %v367
          %402 = vst [vmem:[#allocation2 + $0x8] sm:$0xff] %v393
          %403 = vst [vmem:[#allocation2 + $0x10] sm:$0xff] %v370
          %404 = vst [vmem:[#allocation2 + $0x18] sm:$0xff] %v396
          %405 = vst [vmem:[#allocation2 + $0x20] sm:$0xff] %v373
          %406 = vst [vmem:[#allocation2 + $0x28] sm:$0xff] %v399
        $region52: #{tpu_custom_call.1} parent=47 // pred_fallthru
          _
        %s407 = smul.u32 %s26, 256
        %s408 = sshra.s32 %s407, 7
        %s409 = sand.u32 %s407, 127
        %s410 = smul.addr %s408, 8
        %s411 = scalar_lea.vmem [#allocation2], %s410
        %v412 = vld [vmem:[%s411] sm:$0xf]
        %v413 = vld [vmem:[%s411 + $0x8] sm:$0xf]
        %v414 = vmul.f32 %v412, 0.5
        %v415 = vmul.f32 %v413, 0.5
        %v416 = vld [vmem:[#allocation2 + $0x10] sm:$0xf]
        %v417 = vld [vmem:[#allocation2 + $0x18] sm:$0xf]
        %v418 = vld [vmem:[#allocation2 + $0x20] sm:$0xf]
        %v419 = vld [vmem:[#allocation2 + $0x28] sm:$0xf]
        %420 = vxpose.xlu0.b32.start [1/16] %v416, 128
        %421 = vxpose.xlu0.b32.cont [2/16] 0.0, 128
        %422 = vxpose.xlu0.b32.cont [3/16] 0.0, 128
        %423 = vxpose.xlu0.b32.cont [4/16] 0.0, 128
        %424 = vxpose.xlu0.b32.cont [5/16] 0.0, 128
        %425 = vxpose.xlu0.b32.cont [6/16] 0.0, 128
        %426 = vxpose.xlu0.b32.cont [7/16] 0.0, 128
        %427 = vxpose.xlu0.b32.cont [8/16] 0.0, 128
        %428 = vxpose.xlu0.b32.cont [9/16] 0.0, 128
        %429 = vxpose.xlu0.b32.cont [10/16] 0.0, 128
        %430 = vxpose.xlu0.b32.cont [11/16] 0.0, 128
        %431 = vxpose.xlu0.b32.cont [12/16] 0.0, 128
        %432 = vxpose.xlu0.b32.cont [13/16] 0.0, 128
        %433 = vxpose.xlu0.b32.cont [14/16] 0.0, 128
        %434 = vxpose.xlu0.b32.cont [15/16] 0.0, 128
        %435 = vxpose.xlu0.b32.end [16/16] 0.0, 128
        %v436 = vpop.trf.xlu0
        %v437 = vpop.trf.xlu0
        %v438 = vpop.trf.xlu0
        %v439 = vpop.trf.xlu0
        %v440 = vpop.trf.xlu0
        %v441 = vpop.trf.xlu0
        %v442 = vpop.trf.xlu0
        %v443 = vpop.trf.xlu0
        %v444 = vpop.trf.xlu0
        %v445 = vpop.trf.xlu0
        %v446 = vpop.trf.xlu0
        %v447 = vpop.trf.xlu0
        %v448 = vpop.trf.xlu0
        %v449 = vpop.trf.xlu0
        %v450 = vpop.trf.xlu0
        %v451 = vpop.trf.xlu0
        %452 = vxpose.xlu0.b32.start [1/16] %v417, 128
        %453 = vxpose.xlu0.b32.cont [2/16] 0.0, 128
        %454 = vxpose.xlu0.b32.cont [3/16] 0.0, 128
        %455 = vxpose.xlu0.b32.cont [4/16] 0.0, 128
        %456 = vxpose.xlu0.b32.cont [5/16] 0.0, 128
        %457 = vxpose.xlu0.b32.cont [6/16] 0.0, 128
        %458 = vxpose.xlu0.b32.cont [7/16] 0.0, 128
        %459 = vxpose.xlu0.b32.cont [8/16] 0.0, 128
        %460 = vxpose.xlu0.b32.cont [9/16] 0.0, 128
        %461 = vxpose.xlu0.b32.cont [10/16] 0.0, 128
        %462 = vxpose.xlu0.b32.cont [11/16] 0.0, 128
        %463 = vxpose.xlu0.b32.cont [12/16] 0.0, 128
        %464 = vxpose.xlu0.b32.cont [13/16] 0.0, 128
        %465 = vxpose.xlu0.b32.cont [14/16] 0.0, 128
        %466 = vxpose.xlu0.b32.cont [15/16] 0.0, 128
        %467 = vxpose.xlu0.b32.end [16/16] 0.0, 128
        %v468 = vpop.trf.xlu0
        %v469 = vpop.trf.xlu0
        %v470 = vpop.trf.xlu0
        %v471 = vpop.trf.xlu0
        %v472 = vpop.trf.xlu0
        %v473 = vpop.trf.xlu0
        %v474 = vpop.trf.xlu0
        %v475 = vpop.trf.xlu0
        %v476 = vpop.trf.xlu0
        %v477 = vpop.trf.xlu0
        %v478 = vpop.trf.xlu0
        %v479 = vpop.trf.xlu0
        %v480 = vpop.trf.xlu0
        %v481 = vpop.trf.xlu0
        %v482 = vpop.trf.xlu0
        %v483 = vpop.trf.xlu0
        %vm484 = vcmask 31744
        %v486 = vsel %vm484, %v436, 0
        %v489 = vsel %vm484, %v437, 0
        %v492 = vsel %vm484, %v438, 0
        %v495 = vsel %vm484, %v439, 0
        %v498 = vsel %vm484, %v440, 0
        %v501 = vsel %vm484, %v441, 0
        %v504 = vsel %vm484, %v442, 0
        %v507 = vsel %vm484, %v443, 0
        %v510 = vsel %vm484, %v444, 0
        %v513 = vsel %vm484, %v445, 0
        %v516 = vsel %vm484, %v446, 0
        %v519 = vsel %vm484, %v447, 0
        %v522 = vsel %vm484, %v448, 0
        %v525 = vsel %vm484, %v449, 0
        %v528 = vsel %vm484, %v450, 0
        %v531 = vsel %vm484, %v451, 0
        %v534 = vsel %vm484, %v468, 0
        %v537 = vsel %vm484, %v469, 0
        %v540 = vsel %vm484, %v470, 0
        %v543 = vsel %vm484, %v471, 0
        %v546 = vsel %vm484, %v472, 0
        %v549 = vsel %vm484, %v473, 0
        %v552 = vsel %vm484, %v474, 0
        %v555 = vsel %vm484, %v475, 0
        %v558 = vsel %vm484, %v476, 0
        %v561 = vsel %vm484, %v477, 0
        %v564 = vsel %vm484, %v478, 0
        %v567 = vsel %vm484, %v479, 0
        %v570 = vsel %vm484, %v480, 0
        %v573 = vsel %vm484, %v481, 0
        %v576 = vsel %vm484, %v482, 0
        %v579 = vsel %vm484, %v483, 0
        %vm581 = vcmask 1043456
        %v583 = vsel %vm581, %v414, 0
        %v586 = vsel %vm581, %v415, 0
        %588 = vmatpush.msra.mxu0 0.0
        %589 = vmatpush.msra.mxu0 0.0
        %590 = vmatpush.msra.mxu0 0.0
        %591 = vmatpush.msra.mxu0 0.0
        %592 = vmatpush.msra.mxu0 0.0
        %593 = vmatpush.msra.mxu0 0.0
        %594 = vmatpush.msra.mxu0 0.0
        %595 = vmatpush.msra.mxu0 0.0
        %596 = vmatpush.msra.mxu0 0.0
        %597 = vmatpush.msra.mxu0 0.0
        %598 = vmatpush.msra.mxu0 0.0
        %599 = vmatpush.msra.mxu0 0.0
        %600 = vmatpush.msra.mxu0 0.0
        %601 = vmatpush.msra.mxu0 0.0
        %602 = vmatpush.msra.mxu0 0.0
        %603 = vmatpush.msra.mxu0 %v583
        %604 = vmatmul.f32.gmra.mxu0 %v486
        %v605 = vpop.f32.mrf.mxu0
        %v606 = vadd.f32 0.0, %v605
        %607 = vmatmul.f32.gmra.mxu0 %v489
        %v608 = vpop.f32.mrf.mxu0
        %v609 = vadd.f32 0.0, %v608
        %610 = vmatmul.f32.gmra.mxu0 %v492
        %v611 = vpop.f32.mrf.mxu0
        %v612 = vadd.f32 0.0, %v611
        %613 = vmatmul.f32.gmra.mxu0 %v495
        %v614 = vpop.f32.mrf.mxu0
        %v615 = vadd.f32 0.0, %v614
        %616 = vmatmul.f32.gmra.mxu0 %v498
        %v617 = vpop.f32.mrf.mxu0
        %v618 = vadd.f32 0.0, %v617
        %619 = vmatmul.f32.gmra.mxu0 %v501
        %v620 = vpop.f32.mrf.mxu0
        %v621 = vadd.f32 0.0, %v620
        %622 = vmatmul.f32.gmra.mxu0 %v504
        %v623 = vpop.f32.mrf.mxu0
        %v624 = vadd.f32 0.0, %v623
        %625 = vmatmul.f32.gmra.mxu0 %v507
        %v626 = vpop.f32.mrf.mxu0
        %v627 = vadd.f32 0.0, %v626
        %628 = vmatmul.f32.gmra.mxu0 %v510
        %v629 = vpop.f32.mrf.mxu0
        %v630 = vadd.f32 0.0, %v629
        %631 = vmatmul.f32.gmra.mxu0 %v513
        %v632 = vpop.f32.mrf.mxu0
        %v633 = vadd.f32 0.0, %v632
        %634 = vmatmul.f32.gmra.mxu0 %v516
        %v635 = vpop.f32.mrf.mxu0
        %v636 = vadd.f32 0.0, %v635
        %637 = vmatmul.f32.gmra.mxu0 %v519
        %v638 = vpop.f32.mrf.mxu0
        %v639 = vadd.f32 0.0, %v638
        %640 = vmatmul.f32.gmra.mxu0 %v522
        %v641 = vpop.f32.mrf.mxu0
        %v642 = vadd.f32 0.0, %v641
        %643 = vmatmul.f32.gmra.mxu0 %v525
        %v644 = vpop.f32.mrf.mxu0
        %v645 = vadd.f32 0.0, %v644
        %646 = vmatmul.f32.gmra.mxu0 %v528
        %v647 = vpop.f32.mrf.mxu0
        %v648 = vadd.f32 0.0, %v647
        %649 = vmatmul.f32.gmra.mxu0 %v531
        %v650 = vpop.f32.mrf.mxu0
        %v651 = vadd.f32 0.0, %v650
        %652 = vmatmul.f32.gmra.mxu0 %v534
        %v653 = vpop.f32.mrf.mxu0
        %v654 = vadd.f32 0.0, %v653
        %655 = vmatmul.f32.gmra.mxu0 %v537
        %v656 = vpop.f32.mrf.mxu0
        %v657 = vadd.f32 0.0, %v656
        %658 = vmatmul.f32.gmra.mxu0 %v540
        %v659 = vpop.f32.mrf.mxu0
        %v660 = vadd.f32 0.0, %v659
        %661 = vmatmul.f32.gmra.mxu0 %v543
        %v662 = vpop.f32.mrf.mxu0
        %v663 = vadd.f32 0.0, %v662
        %664 = vmatmul.f32.gmra.mxu0 %v546
        %v665 = vpop.f32.mrf.mxu0
        %v666 = vadd.f32 0.0, %v665
        %667 = vmatmul.f32.gmra.mxu0 %v549
        %v668 = vpop.f32.mrf.mxu0
        %v669 = vadd.f32 0.0, %v668
        %670 = vmatmul.f32.gmra.mxu0 %v552
        %v671 = vpop.f32.mrf.mxu0
        %v672 = vadd.f32 0.0, %v671
        %673 = vmatmul.f32.gmra.mxu0 %v555
        %v674 = vpop.f32.mrf.mxu0
        %v675 = vadd.f32 0.0, %v674
        %676 = vmatmul.f32.gmra.mxu0 %v558
        %v677 = vpop.f32.mrf.mxu0
        %v678 = vadd.f32 0.0, %v677
        %679 = vmatmul.f32.gmra.mxu0 %v561
        %v680 = vpop.f32.mrf.mxu0
        %v681 = vadd.f32 0.0, %v680
        %682 = vmatmul.f32.gmra.mxu0 %v564
        %v683 = vpop.f32.mrf.mxu0
        %v684 = vadd.f32 0.0, %v683
        %685 = vmatmul.f32.gmra.mxu0 %v567
        %v686 = vpop.f32.mrf.mxu0
        %v687 = vadd.f32 0.0, %v686
        %688 = vmatmul.f32.gmra.mxu0 %v570
        %v689 = vpop.f32.mrf.mxu0
        %v690 = vadd.f32 0.0, %v689
        %691 = vmatmul.f32.gmra.mxu0 %v573
        %v692 = vpop.f32.mrf.mxu0
        %v693 = vadd.f32 0.0, %v692
        %694 = vmatmul.f32.gmra.mxu0 %v576
        %v695 = vpop.f32.mrf.mxu0
        %v696 = vadd.f32 0.0, %v695
        %697 = vmatmul.f32.gmra.mxu0 %v579
        %v698 = vpop.f32.mrf.mxu0
        %v699 = vadd.f32 0.0, %v698
        %700 = vdwg.mxu0
        %701 = vmatpush.msra.mxu0 0.0
        %702 = vmatpush.msra.mxu0 0.0
        %703 = vmatpush.msra.mxu0 0.0
        %704 = vmatpush.msra.mxu0 0.0
        %705 = vmatpush.msra.mxu0 0.0
        %706 = vmatpush.msra.mxu0 0.0
        %707 = vmatpush.msra.mxu0 0.0
        %708 = vmatpush.msra.mxu0 0.0
        %709 = vmatpush.msra.mxu0 0.0
        %710 = vmatpush.msra.mxu0 0.0
        %711 = vmatpush.msra.mxu0 0.0
        %712 = vmatpush.msra.mxu0 0.0
        %713 = vmatpush.msra.mxu0 0.0
        %714 = vmatpush.msra.mxu0 0.0
        %715 = vmatpush.msra.mxu0 0.0
        %716 = vmatpush.msra.mxu0 %v586
        %717 = vmatmul.f32.gmra.mxu0 %v486
        %v718 = vpop.f32.mrf.mxu0
        %v719 = vadd.f32 0.0, %v718
        %720 = vmatmul.f32.gmra.mxu0 %v489
        %v721 = vpop.f32.mrf.mxu0
        %v722 = vadd.f32 0.0, %v721
        %723 = vmatmul.f32.gmra.mxu0 %v492
        %v724 = vpop.f32.mrf.mxu0
        %v725 = vadd.f32 0.0, %v724
        %726 = vmatmul.f32.gmra.mxu0 %v495
        %v727 = vpop.f32.mrf.mxu0
        %v728 = vadd.f32 0.0, %v727
        %729 = vmatmul.f32.gmra.mxu0 %v498
        %v730 = vpop.f32.mrf.mxu0
        %v731 = vadd.f32 0.0, %v730
        %732 = vmatmul.f32.gmra.mxu0 %v501
        %v733 = vpop.f32.mrf.mxu0
        %v734 = vadd.f32 0.0, %v733
        %735 = vmatmul.f32.gmra.mxu0 %v504
        %v736 = vpop.f32.mrf.mxu0
        %v737 = vadd.f32 0.0, %v736
        %738 = vmatmul.f32.gmra.mxu0 %v507
        %v739 = vpop.f32.mrf.mxu0
        %v740 = vadd.f32 0.0, %v739
        %741 = vmatmul.f32.gmra.mxu0 %v510
        %v742 = vpop.f32.mrf.mxu0
        %v743 = vadd.f32 0.0, %v742
        %744 = vmatmul.f32.gmra.mxu0 %v513
        %v745 = vpop.f32.mrf.mxu0
        %v746 = vadd.f32 0.0, %v745
        %747 = vmatmul.f32.gmra.mxu0 %v516
        %v748 = vpop.f32.mrf.mxu0
        %v749 = vadd.f32 0.0, %v748
        %750 = vmatmul.f32.gmra.mxu0 %v519
        %v751 = vpop.f32.mrf.mxu0
        %v752 = vadd.f32 0.0, %v751
        %753 = vmatmul.f32.gmra.mxu0 %v522
        %v754 = vpop.f32.mrf.mxu0
        %v755 = vadd.f32 0.0, %v754
        %756 = vmatmul.f32.gmra.mxu0 %v525
        %v757 = vpop.f32.mrf.mxu0
        %v758 = vadd.f32 0.0, %v757
        %759 = vmatmul.f32.gmra.mxu0 %v528
        %v760 = vpop.f32.mrf.mxu0
        %v761 = vadd.f32 0.0, %v760
        %762 = vmatmul.f32.gmra.mxu0 %v531
        %v763 = vpop.f32.mrf.mxu0
        %v764 = vadd.f32 0.0, %v763
        %765 = vmatmul.f32.gmra.mxu0 %v534
        %v766 = vpop.f32.mrf.mxu0
        %v767 = vadd.f32 0.0, %v766
        %768 = vmatmul.f32.gmra.mxu0 %v537
        %v769 = vpop.f32.mrf.mxu0
        %v770 = vadd.f32 0.0, %v769
        %771 = vmatmul.f32.gmra.mxu0 %v540
        %v772 = vpop.f32.mrf.mxu0
        %v773 = vadd.f32 0.0, %v772
        %774 = vmatmul.f32.gmra.mxu0 %v543
        %v775 = vpop.f32.mrf.mxu0
        %v776 = vadd.f32 0.0, %v775
        %777 = vmatmul.f32.gmra.mxu0 %v546
        %v778 = vpop.f32.mrf.mxu0
        %v779 = vadd.f32 0.0, %v778
        %780 = vmatmul.f32.gmra.mxu0 %v549
        %v781 = vpop.f32.mrf.mxu0
        %v782 = vadd.f32 0.0, %v781
        %783 = vmatmul.f32.gmra.mxu0 %v552
        %v784 = vpop.f32.mrf.mxu0
        %v785 = vadd.f32 0.0, %v784
        %786 = vmatmul.f32.gmra.mxu0 %v555
        %v787 = vpop.f32.mrf.mxu0
        %v788 = vadd.f32 0.0, %v787
        %789 = vmatmul.f32.gmra.mxu0 %v558
        %v790 = vpop.f32.mrf.mxu0
        %v791 = vadd.f32 0.0, %v790
        %792 = vmatmul.f32.gmra.mxu0 %v561
        %v793 = vpop.f32.mrf.mxu0
        %v794 = vadd.f32 0.0, %v793
        %795 = vmatmul.f32.gmra.mxu0 %v564
        %v796 = vpop.f32.mrf.mxu0
        %v797 = vadd.f32 0.0, %v796
        %798 = vmatmul.f32.gmra.mxu0 %v567
        %v799 = vpop.f32.mrf.mxu0
        %v800 = vadd.f32 0.0, %v799
        %801 = vmatmul.f32.gmra.mxu0 %v570
        %v802 = vpop.f32.mrf.mxu0
        %v803 = vadd.f32 0.0, %v802
        %804 = vmatmul.f32.gmra.mxu0 %v573
        %v805 = vpop.f32.mrf.mxu0
        %v806 = vadd.f32 0.0, %v805
        %807 = vmatmul.f32.gmra.mxu0 %v576
        %v808 = vpop.f32.mrf.mxu0
        %v809 = vadd.f32 0.0, %v808
        %810 = vmatmul.f32.gmra.mxu0 %v579
        %v811 = vpop.f32.mrf.mxu0
        %v812 = vadd.f32 0.0, %v811
        %813 = vdwg.mxu0
        %v814 = vmax.f32 %v606, %v612
        %v815 = vmax.f32 %v609, %v615
        %v816 = vmax.f32 %v814, %v618
        %v817 = vmax.f32 %v815, %v621
        %v818 = vmax.f32 %v816, %v624
        %v819 = vmax.f32 %v817, %v627
        %v820 = vmax.f32 %v818, %v630
        %v821 = vmax.f32 %v819, %v633
        %v822 = vmax.f32 %v820, %v636
        %v823 = vmax.f32 %v821, %v639
        %v824 = vmax.f32 %v822, %v642
        %v825 = vmax.f32 %v823, %v645
        %v826 = vmax.f32 %v824, %v648
        %v827 = vmax.f32 %v825, %v651
        %v828 = vmax.f32 %v826, %v654
        %v829 = vmax.f32 %v827, %v657
        %v830 = vmax.f32 %v828, %v660
        %v831 = vmax.f32 %v829, %v663
        %v832 = vmax.f32 %v830, %v666
        %v833 = vmax.f32 %v831, %v669
        %v834 = vmax.f32 %v832, %v672
        %v835 = vmax.f32 %v833, %v675
        %v836 = vmax.f32 %v834, %v678
        %v837 = vmax.f32 %v835, %v681
        %v838 = vmax.f32 %v836, %v684
        %v839 = vmax.f32 %v837, %v687
        %v840 = vmax.f32 %v838, %v690
        %v841 = vmax.f32 %v839, %v693
        %v842 = vmax.f32 %v840, %v696
        %v843 = vmax.f32 %v841, %v699
        %v844 = vmax.f32 %v842, %v843
        %v845 = vrot.slane %v844, 4
        %v846 = vmax.f32 %v844, %v845
        %v847 = vrot.slane %v846, 2
        %v848 = vmax.f32 %v846, %v847
        %v849 = vrot.slane %v848, 1
        %v850 = vmax.f32 %v848, %v849
        %v851 = vmax.f32 %v719, %v725
        %v852 = vmax.f32 %v722, %v728
        %v853 = vmax.f32 %v851, %v731
        %v854 = vmax.f32 %v852, %v734
        %v855 = vmax.f32 %v853, %v737
        %v856 = vmax.f32 %v854, %v740
        %v857 = vmax.f32 %v855, %v743
        %v858 = vmax.f32 %v856, %v746
        %v859 = vmax.f32 %v857, %v749
        %v860 = vmax.f32 %v858, %v752
        %v861 = vmax.f32 %v859, %v755
        %v862 = vmax.f32 %v860, %v758
        %v863 = vmax.f32 %v861, %v761
        %v864 = vmax.f32 %v862, %v764
        %v865 = vmax.f32 %v863, %v767
        %v866 = vmax.f32 %v864, %v770
        %v867 = vmax.f32 %v865, %v773
        %v868 = vmax.f32 %v866, %v776
        %v869 = vmax.f32 %v867, %v779
        %v870 = vmax.f32 %v868, %v782
        %v871 = vmax.f32 %v869, %v785
        %v872 = vmax.f32 %v870, %v788
        %v873 = vmax.f32 %v871, %v791
        %v874 = vmax.f32 %v872, %v794
        %v875 = vmax.f32 %v873, %v797
        %v876 = vmax.f32 %v874, %v800
        %v877 = vmax.f32 %v875, %v803
        %v878 = vmax.f32 %v876, %v806
        %v879 = vmax.f32 %v877, %v809
        %v880 = vmax.f32 %v878, %v812
        %v881 = vmax.f32 %v879, %v880
        %v882 = vrot.slane %v881, 4
        %v883 = vmax.f32 %v881, %v882
        %v884 = vrot.slane %v883, 2
        %v885 = vmax.f32 %v883, %v884
        %v886 = vrot.slane %v885, 1
        %v887 = vmax.f32 %v885, %v886
        %v888 = vsub.f32 %v606, %v850
        %v889 = vsub.f32 %v719, %v887
        %v890 = vsub.f32 %v609, %v850
        %v891 = vsub.f32 %v722, %v887
        %v892 = vsub.f32 %v612, %v850
        %v893 = vsub.f32 %v725, %v887
        %v894 = vsub.f32 %v615, %v850
        %v895 = vsub.f32 %v728, %v887
        %v896 = vsub.f32 %v618, %v850
        %v897 = vsub.f32 %v731, %v887
        %v898 = vsub.f32 %v621, %v850
        %v899 = vsub.f32 %v734, %v887
        %v900 = vsub.f32 %v624, %v850
        %v901 = vsub.f32 %v737, %v887
        %v902 = vsub.f32 %v627, %v850
        %v903 = vsub.f32 %v740, %v887
        %v904 = vsub.f32 %v630, %v850
        %v905 = vsub.f32 %v743, %v887
        %v906 = vsub.f32 %v633, %v850
        %v907 = vsub.f32 %v746, %v887
        %v908 = vsub.f32 %v636, %v850
        %v909 = vsub.f32 %v749, %v887
        %v910 = vsub.f32 %v639, %v850
        %v911 = vsub.f32 %v752, %v887
        %v912 = vsub.f32 %v642, %v850
        %v913 = vsub.f32 %v755, %v887
        %v914 = vsub.f32 %v645, %v850
        %v915 = vsub.f32 %v758, %v887
        %v916 = vsub.f32 %v648, %v850
        %v917 = vsub.f32 %v761, %v887
        %v918 = vsub.f32 %v651, %v850
        %v919 = vsub.f32 %v764, %v887
        %v920 = vsub.f32 %v654, %v850
        %v921 = vsub.f32 %v767, %v887
        %v922 = vsub.f32 %v657, %v850
        %v923 = vsub.f32 %v770, %v887
        %v924 = vsub.f32 %v660, %v850
        %v925 = vsub.f32 %v773, %v887
        %v926 = vsub.f32 %v663, %v850
        %v927 = vsub.f32 %v776, %v887
        %v928 = vsub.f32 %v666, %v850
        %v929 = vsub.f32 %v779, %v887
        %v930 = vsub.f32 %v669, %v850
        %v931 = vsub.f32 %v782, %v887
        %v932 = vsub.f32 %v672, %v850
        %v933 = vsub.f32 %v785, %v887
        %v934 = vsub.f32 %v675, %v850
        %v935 = vsub.f32 %v788, %v887
        %v936 = vsub.f32 %v678, %v850
        %v937 = vsub.f32 %v791, %v887
        %v938 = vsub.f32 %v681, %v850
        %v939 = vsub.f32 %v794, %v887
        %v940 = vsub.f32 %v684, %v850
        %v941 = vsub.f32 %v797, %v887
        %v942 = vsub.f32 %v687, %v850
        %v943 = vsub.f32 %v800, %v887
        %v944 = vsub.f32 %v690, %v850
        %v945 = vsub.f32 %v803, %v887
        %v946 = vsub.f32 %v693, %v850
        %v947 = vsub.f32 %v806, %v887
        %v948 = vsub.f32 %v696, %v850
        %v949 = vsub.f32 %v809, %v887
        %v950 = vsub.f32 %v699, %v850
        %v951 = vsub.f32 %v812, %v887
        %v952 = vmul.f32 %v888, 1.442695
        %v953 = vpow.pop %v952
        %v954 = vmul.f32 %v889, 1.442695
        %v955 = vpow.pop %v954
        %v956 = vmul.f32 %v890, 1.442695
        %v957 = vpow.pop %v956
        %v958 = vmul.f32 %v891, 1.442695
        %v959 = vpow.pop %v958
        %v960 = vmul.f32 %v892, 1.442695
        %v961 = vpow.pop %v960
        %v962 = vmul.f32 %v893, 1.442695
        %v963 = vpow.pop %v962
        %v964 = vmul.f32 %v894, 1.442695
        %v965 = vpow.pop %v964
        %v966 = vmul.f32 %v895, 1.442695
        %v967 = vpow.pop %v966
        %v968 = vmul.f32 %v896, 1.442695
        %v969 = vpow.pop %v968
        %v970 = vmul.f32 %v897, 1.442695
        %v971 = vpow.pop %v970
        %v972 = vmul.f32 %v898, 1.442695
        %v973 = vpow.pop %v972
        %v974 = vmul.f32 %v899, 1.442695
        %v975 = vpow.pop %v974
        %v976 = vmul.f32 %v900, 1.442695
        %v977 = vpow.pop %v976
        %v978 = vmul.f32 %v901, 1.442695
        %v979 = vpow.pop %v978
        %v980 = vmul.f32 %v902, 1.442695
        %v981 = vpow.pop %v980
        %v982 = vmul.f32 %v903, 1.442695
        %v983 = vpow.pop %v982
        %v984 = vmul.f32 %v904, 1.442695
        %v985 = vpow.pop %v984
        %v986 = vmul.f32 %v905, 1.442695
        %v987 = vpow.pop %v986
        %v988 = vmul.f32 %v906, 1.442695
        %v989 = vpow.pop %v988
        %v990 = vmul.f32 %v907, 1.442695
        %v991 = vpow.pop %v990
        %v992 = vmul.f32 %v908, 1.442695
        %v993 = vpow.pop %v992
        %v994 = vmul.f32 %v909, 1.442695
        %v995 = vpow.pop %v994
        %v996 = vmul.f32 %v910, 1.442695
        %v997 = vpow.pop %v996
        %v998 = vmul.f32 %v911, 1.442695
        %v999 = vpow.pop %v998
        %v1000 = vmul.f32 %v912, 1.442695
        %v1001 = vpow.pop %v1000
        %v1002 = vmul.f32 %v913, 1.442695
        %v1003 = vpow.pop %v1002
        %v1004 = vmul.f32 %v914, 1.442695
        %v1005 = vpow.pop %v1004
        %v1006 = vmul.f32 %v915, 1.442695
        %v1007 = vpow.pop %v1006
        %v1008 = vmul.f32 %v916, 1.442695
        %v1009 = vpow.pop %v1008
        %v1010 = vmul.f32 %v917, 1.442695
        %v1011 = vpow.pop %v1010
        %v1012 = vmul.f32 %v918, 1.442695
        %v1013 = vpow.pop %v1012
        %v1014 = vmul.f32 %v919, 1.442695
        %v1015 = vpow.pop %v1014
        %v1016 = vmul.f32 %v920, 1.442695
        %v1017 = vpow.pop %v1016
        %v1018 = vmul.f32 %v921, 1.442695
        %v1019 = vpow.pop %v1018
        %v1020 = vmul.f32 %v922, 1.442695
        %v1021 = vpow.pop %v1020
        %v1022 = vmul.f32 %v923, 1.442695
        %v1023 = vpow.pop %v1022
        %v1024 = vmul.f32 %v924, 1.442695
        %v1025 = vpow.pop %v1024
        %v1026 = vmul.f32 %v925, 1.442695
        %v1027 = vpow.pop %v1026
        %v1028 = vmul.f32 %v926, 1.442695
        %v1029 = vpow.pop %v1028
        %v1030 = vmul.f32 %v927, 1.442695
        %v1031 = vpow.pop %v1030
        %v1032 = vmul.f32 %v928, 1.442695
        %v1033 = vpow.pop %v1032
        %v1034 = vmul.f32 %v929, 1.442695
        %v1035 = vpow.pop %v1034
        %v1036 = vmul.f32 %v930, 1.442695
        %v1037 = vpow.pop %v1036
        %v1038 = vmul.f32 %v931, 1.442695
        %v1039 = vpow.pop %v1038
        %v1040 = vmul.f32 %v932, 1.442695
        %v1041 = vpow.pop %v1040
        %v1042 = vmul.f32 %v933, 1.442695
        %v1043 = vpow.pop %v1042
        %v1044 = vmul.f32 %v934, 1.442695
        %v1045 = vpow.pop %v1044
        %v1046 = vmul.f32 %v935, 1.442695
        %v1047 = vpow.pop %v1046
        %v1048 = vmul.f32 %v936, 1.442695
        %v1049 = vpow.pop %v1048
        %v1050 = vmul.f32 %v937, 1.442695
        %v1051 = vpow.pop %v1050
        %v1052 = vmul.f32 %v938, 1.442695
        %v1053 = vpow.pop %v1052
        %v1054 = vmul.f32 %v939, 1.442695
        %v1055 = vpow.pop %v1054
        %v1056 = vmul.f32 %v940, 1.442695
        %v1057 = vpow.pop %v1056
        %v1058 = vmul.f32 %v941, 1.442695
        %v1059 = vpow.pop %v1058
        %v1060 = vmul.f32 %v942, 1.442695
        %v1061 = vpow.pop %v1060
        %v1062 = vmul.f32 %v943, 1.442695
        %v1063 = vpow.pop %v1062
        %v1064 = vmul.f32 %v944, 1.442695
        %v1065 = vpow.pop %v1064
        %v1066 = vmul.f32 %v945, 1.442695
        %v1067 = vpow.pop %v1066
        %v1068 = vmul.f32 %v946, 1.442695
        %v1069 = vpow.pop %v1068
        %v1070 = vmul.f32 %v947, 1.442695
        %v1071 = vpow.pop %v1070
        %v1072 = vmul.f32 %v948, 1.442695
        %v1073 = vpow.pop %v1072
        %v1074 = vmul.f32 %v949, 1.442695
        %v1075 = vpow.pop %v1074
        %v1076 = vmul.f32 %v950, 1.442695
        %v1077 = vpow.pop %v1076
        %v1078 = vmul.f32 %v951, 1.442695
        %v1079 = vpow.pop %v1078
        %v1080 = vadd.f32 %v953, %v957
        %v1081 = vadd.f32 %v1080, %v961
        %v1082 = vadd.f32 %v1081, %v965
        %v1083 = vadd.f32 %v1082, %v969
        %v1084 = vadd.f32 %v1083, %v973
        %v1085 = vadd.f32 %v1084, %v977
        %v1086 = vadd.f32 %v1085, %v981
        %v1087 = vadd.f32 %v1086, %v985
        %v1088 = vadd.f32 %v1087, %v989
        %v1089 = vadd.f32 %v1088, %v993
        %v1090 = vadd.f32 %v1089, %v997
        %v1091 = vadd.f32 %v1090, %v1001
        %v1092 = vadd.f32 %v1091, %v1005
        %v1093 = vadd.f32 %v1092, %v1009
        %v1094 = vadd.f32 %v1093, %v1013
        %v1095 = vadd.f32 %v1094, %v1017
        %v1096 = vadd.f32 %v1095, %v1021
        %v1097 = vadd.f32 %v1096, %v1025
        %v1098 = vadd.f32 %v1097, %v1029
        %v1099 = vadd.f32 %v1098, %v1033
        %v1100 = vadd.f32 %v1099, %v1037
        %v1101 = vadd.f32 %v1100, %v1041
        %v1102 = vadd.f32 %v1101, %v1045
        %v1103 = vadd.f32 %v1102, %v1049
        %v1104 = vadd.f32 %v1103, %v1053
        %v1105 = vadd.f32 %v1104, %v1057
        %v1106 = vadd.f32 %v1105, %v1061
        %v1107 = vadd.f32 %v1106, %v1065
        %v1108 = vadd.f32 %v1107, %v1069
        %v1109 = vadd.f32 %v1108, %v1073
        %v1110 = vadd.f32 %v1109, %v1077
        %v1111 = vrot.slane %v1110, 4
        %v1112 = vadd.f32 %v1110, %v1111
        %v1113 = vrot.slane %v1112, 2
        %v1114 = vadd.f32 %v1112, %v1113
        %v1115 = vrot.slane %v1114, 1
        %v1116 = vadd.f32 %v1114, %v1115
        %v1117 = vadd.f32 %v955, %v959
        %v1118 = vadd.f32 %v1117, %v963
        %v1119 = vadd.f32 %v1118, %v967
        %v1120 = vadd.f32 %v1119, %v971
        %v1121 = vadd.f32 %v1120, %v975
        %v1122 = vadd.f32 %v1121, %v979
        %v1123 = vadd.f32 %v1122, %v983
        %v1124 = vadd.f32 %v1123, %v987
        %v1125 = vadd.f32 %v1124, %v991
        %v1126 = vadd.f32 %v1125, %v995
        %v1127 = vadd.f32 %v1126, %v999
        %v1128 = vadd.f32 %v1127, %v1003
        %v1129 = vadd.f32 %v1128, %v1007
        %v1130 = vadd.f32 %v1129, %v1011
        %v1131 = vadd.f32 %v1130, %v1015
        %v1132 = vadd.f32 %v1131, %v1019
        %v1133 = vadd.f32 %v1132, %v1023
        %v1134 = vadd.f32 %v1133, %v1027
        %v1135 = vadd.f32 %v1134, %v1031
        %v1136 = vadd.f32 %v1135, %v1035
        %v1137 = vadd.f32 %v1136, %v1039
        %v1138 = vadd.f32 %v1137, %v1043
        %v1139 = vadd.f32 %v1138, %v1047
        %v1140 = vadd.f32 %v1139, %v1051
        %v1141 = vadd.f32 %v1140, %v1055
        %v1142 = vadd.f32 %v1141, %v1059
        %v1143 = vadd.f32 %v1142, %v1063
        %v1144 = vadd.f32 %v1143, %v1067
        %v1145 = vadd.f32 %v1144, %v1071
        %v1146 = vadd.f32 %v1145, %v1075
        %v1147 = vadd.f32 %v1146, %v1079
        %v1148 = vrot.slane %v1147, 4
        %v1149 = vadd.f32 %v1147, %v1148
        %v1150 = vrot.slane %v1149, 2
        %v1151 = vadd.f32 %v1149, %v1150
        %v1152 = vrot.slane %v1151, 1
        %v1153 = vadd.f32 %v1151, %v1152
        %1154 = vmatpush.msra.mxu0 %v1013
        %1155 = vmatpush.msra.mxu0 %v1009
        %1156 = vmatpush.msra.mxu0 %v1005
        %1157 = vmatpush.msra.mxu0 %v1001
        %1158 = vmatpush.msra.mxu0 %v997
        %1159 = vmatpush.msra.mxu0 %v993
        %1160 = vmatpush.msra.mxu0 %v989
        %1161 = vmatpush.msra.mxu0 %v985
        %1162 = vmatpush.msra.mxu0 %v981
        %1163 = vmatpush.msra.mxu0 %v977
        %1164 = vmatpush.msra.mxu0 %v973
        %1165 = vmatpush.msra.mxu0 %v969
        %1166 = vmatpush.msra.mxu0 %v965
        %1167 = vmatpush.msra.mxu0 %v961
        %1168 = vmatpush.msra.mxu0 %v957
        %1169 = vmatpush.msra.mxu0 %v953
        %1170 = vmatmul.f32.gmra.mxu0 %v418
        %v1171 = vpop.f32.mrf.mxu0
        %v1172 = vadd.f32 0.0, %v1171
        %1173 = vdwg.mxu0
        %1174 = vmatpush.msra.mxu0 %v1077
        %1175 = vmatpush.msra.mxu0 %v1073
        %1176 = vmatpush.msra.mxu0 %v1069
        %1177 = vmatpush.msra.mxu0 %v1065
        %1178 = vmatpush.msra.mxu0 %v1061
        %1179 = vmatpush.msra.mxu0 %v1057
        %1180 = vmatpush.msra.mxu0 %v1053
        %1181 = vmatpush.msra.mxu0 %v1049
        %1182 = vmatpush.msra.mxu0 %v1045
        %1183 = vmatpush.msra.mxu0 %v1041
        %1184 = vmatpush.msra.mxu0 %v1037
        %1185 = vmatpush.msra.mxu0 %v1033
        %1186 = vmatpush.msra.mxu0 %v1029
        %1187 = vmatpush.msra.mxu0 %v1025
        %1188 = vmatpush.msra.mxu0 %v1021
        %1189 = vmatpush.msra.mxu0 %v1017
        %1190 = vmatmul.f32.gmra.mxu0 %v419
        %v1191 = vpop.f32.mrf.mxu0
        %v1192 = vadd.f32 %v1172, %v1191
        %1193 = vdwg.mxu0
        %1194 = vmatpush.msra.mxu0 %v1015
        %1195 = vmatpush.msra.mxu0 %v1011
        %1196 = vmatpush.msra.mxu0 %v1007
        %1197 = vmatpush.msra.mxu0 %v1003
        %1198 = vmatpush.msra.mxu0 %v999
        %1199 = vmatpush.msra.mxu0 %v995
        %1200 = vmatpush.msra.mxu0 %v991
        %1201 = vmatpush.msra.mxu0 %v987
        %1202 = vmatpush.msra.mxu0 %v983
        %1203 = vmatpush.msra.mxu0 %v979
        %1204 = vmatpush.msra.mxu0 %v975
        %1205 = vmatpush.msra.mxu0 %v971
        %1206 = vmatpush.msra.mxu0 %v967
        %1207 = vmatpush.msra.mxu0 %v963
        %1208 = vmatpush.msra.mxu0 %v959
        %1209 = vmatpush.msra.mxu0 %v955
        %1210 = vmatmul.f32.gmra.mxu0 %v418
        %v1211 = vpop.f32.mrf.mxu0
        %v1212 = vadd.f32 0.0, %v1211
        %1213 = vdwg.mxu0
        %1214 = vmatpush.msra.mxu0 %v1079
        %1215 = vmatpush.msra.mxu0 %v1075
        %1216 = vmatpush.msra.mxu0 %v1071
        %1217 = vmatpush.msra.mxu0 %v1067
        %1218 = vmatpush.msra.mxu0 %v1063
        %1219 = vmatpush.msra.mxu0 %v1059
        %1220 = vmatpush.msra.mxu0 %v1055
        %1221 = vmatpush.msra.mxu0 %v1051
        %1222 = vmatpush.msra.mxu0 %v1047
        %1223 = vmatpush.msra.mxu0 %v1043
        %1224 = vmatpush.msra.mxu0 %v1039
        %1225 = vmatpush.msra.mxu0 %v1035
        %1226 = vmatpush.msra.mxu0 %v1031
        %1227 = vmatpush.msra.mxu0 %v1027
        %1228 = vmatpush.msra.mxu0 %v1023
        %1229 = vmatpush.msra.mxu0 %v1019
        %1230 = vmatmul.f32.gmra.mxu0 %v419
        %v1231 = vpop.f32.mrf.mxu0
        %v1232 = vadd.f32 %v1212, %v1231
        %1233 = vdwg.mxu0
        %v1234 = vrcp.pop %v1116
        %v1235 = vrcp.pop %v1153
        %v1236 = vmul.f32 %v1192, %v1234
        %v1237 = vmul.f32 %v1232, %v1235
        %v1238 = vld [vmem:[%s411] sm:$0xf0]
        %v1239 = vld [vmem:[%s411 + $0x8] sm:$0xf0]
        %v1240 = vmul.f32 %v1238, 0.5
        %v1241 = vmul.f32 %v1239, 0.5
        %v1242 = vld [vmem:[#allocation2 + $0x10] sm:$0xf0]
        %v1243 = vld [vmem:[#allocation2 + $0x18] sm:$0xf0]
        %v1244 = vld [vmem:[#allocation2 + $0x20] sm:$0xf0]
        %v1245 = vld [vmem:[#allocation2 + $0x28] sm:$0xf0]
        %v1248 = vrot.slane %v1242, 4
        %v1249 = vrot.slane %v1243, 4
        %1252 = vxpose.xlu0.b32.start [1/16] %v1248, 128
        %1253 = vxpose.xlu0.b32.cont [2/16] 0.0, 128
        %1254 = vxpose.xlu0.b32.cont [3/16] 0.0, 128
        %1255 = vxpose.xlu0.b32.cont [4/16] 0.0, 128
        %1256 = vxpose.xlu0.b32.cont [5/16] 0.0, 128
        %1257 = vxpose.xlu0.b32.cont [6/16] 0.0, 128
        %1258 = vxpose.xlu0.b32.cont [7/16] 0.0, 128
        %1259 = vxpose.xlu0.b32.cont [8/16] 0.0, 128
        %1260 = vxpose.xlu0.b32.cont [9/16] 0.0, 128
        %1261 = vxpose.xlu0.b32.cont [10/16] 0.0, 128
        %1262 = vxpose.xlu0.b32.cont [11/16] 0.0, 128
        %1263 = vxpose.xlu0.b32.cont [12/16] 0.0, 128
        %1264 = vxpose.xlu0.b32.cont [13/16] 0.0, 128
        %1265 = vxpose.xlu0.b32.cont [14/16] 0.0, 128
        %1266 = vxpose.xlu0.b32.cont [15/16] 0.0, 128
        %1267 = vxpose.xlu0.b32.end [16/16] 0.0, 128
        %v1268 = vpop.trf.xlu0
        %v1269 = vpop.trf.xlu0
        %v1270 = vpop.trf.xlu0
        %v1271 = vpop.trf.xlu0
        %v1272 = vpop.trf.xlu0
        %v1273 = vpop.trf.xlu0
        %v1274 = vpop.trf.xlu0
        %v1275 = vpop.trf.xlu0
        %v1276 = vpop.trf.xlu0
        %v1277 = vpop.trf.xlu0
        %v1278 = vpop.trf.xlu0
        %v1279 = vpop.trf.xlu0
        %v1280 = vpop.trf.xlu0
        %v1281 = vpop.trf.xlu0
        %v1282 = vpop.trf.xlu0
        %v1283 = vpop.trf.xlu0
        %1284 = vxpose.xlu0.b32.start [1/16] %v1249, 128
        %1285 = vxpose.xlu0.b32.cont [2/16] 0.0, 128
        %1286 = vxpose.xlu0.b32.cont [3/16] 0.0, 128
        %1287 = vxpose.xlu0.b32.cont [4/16] 0.0, 128
        %1288 = vxpose.xlu0.b32.cont [5/16] 0.0, 128
        %1289 = vxpose.xlu0.b32.cont [6/16] 0.0, 128
        %1290 = vxpose.xlu0.b32.cont [7/16] 0.0, 128
        %1291 = vxpose.xlu0.b32.cont [8/16] 0.0, 128
        %1292 = vxpose.xlu0.b32.cont [9/16] 0.0, 128
        %1293 = vxpose.xlu0.b32.cont [10/16] 0.0, 128
        %1294 = vxpose.xlu0.b32.cont [11/16] 0.0, 128
        %1295 = vxpose.xlu0.b32.cont [12/16] 0.0, 128
        %1296 = vxpose.xlu0.b32.cont [13/16] 0.0, 128
        %1297 = vxpose.xlu0.b32.cont [14/16] 0.0, 128
        %1298 = vxpose.xlu0.b32.cont [15/16] 0.0, 128
        %1299 = vxpose.xlu0.b32.end [16/16] 0.0, 128
        %v1300 = vpop.trf.xlu0
        %v1301 = vpop.trf.xlu0
        %v1302 = vpop.trf.xlu0
        %v1303 = vpop.trf.xlu0
        %v1304 = vpop.trf.xlu0
        %v1305 = vpop.trf.xlu0
        %v1306 = vpop.trf.xlu0
        %v1307 = vpop.trf.xlu0
        %v1308 = vpop.trf.xlu0
        %v1309 = vpop.trf.xlu0
        %v1310 = vpop.trf.xlu0
        %v1311 = vpop.trf.xlu0
        %v1312 = vpop.trf.xlu0
        %v1313 = vpop.trf.xlu0
        %v1314 = vpop.trf.xlu0
        %v1315 = vpop.trf.xlu0
        %v1318 = vrot.slane %v1240, 4
        %v1319 = vrot.slane %v1241, 4
        %v1321 = vsel %vm484, %v1268, 0
        %v1324 = vsel %vm484, %v1269, 0
        %v1327 = vsel %vm484, %v1270, 0
        %v1330 = vsel %vm484, %v1271, 0
        %v1333 = vsel %vm484, %v1272, 0
        %v1336 = vsel %vm484, %v1273, 0
        %v1339 = vsel %vm484, %v1274, 0
        %v1342 = vsel %vm484, %v1275, 0
        %v1345 = vsel %vm484, %v1276, 0
        %v1348 = vsel %vm484, %v1277, 0
        %v1351 = vsel %vm484, %v1278, 0
        %v1354 = vsel %vm484, %v1279, 0
        %v1357 = vsel %vm484, %v1280, 0
        %v1360 = vsel %vm484, %v1281, 0
        %v1363 = vsel %vm484, %v1282, 0
        %v1366 = vsel %vm484, %v1283, 0
        %v1369 = vsel %vm484, %v1300, 0
        %v1372 = vsel %vm484, %v1301, 0
        %v1375 = vsel %vm484, %v1302, 0
        %v1378 = vsel %vm484, %v1303, 0
        %v1381 = vsel %vm484, %v1304, 0
        %v1384 = vsel %vm484, %v1305, 0
        %v1387 = vsel %vm484, %v1306, 0
        %v1390 = vsel %vm484, %v1307, 0
        %v1393 = vsel %vm484, %v1308, 0
        %v1396 = vsel %vm484, %v1309, 0
        %v1399 = vsel %vm484, %v1310, 0
        %v1402 = vsel %vm484, %v1311, 0
        %v1405 = vsel %vm484, %v1312, 0
        %v1408 = vsel %vm484, %v1313, 0
        %v1411 = vsel %vm484, %v1314, 0
        %v1414 = vsel %vm484, %v1315, 0
        %v1416 = vsel %vm581, %v1318, 0
        %v1418 = vsel %vm581, %v1319, 0
        %1420 = vmatpush.msra.mxu0 0.0
        %1421 = vmatpush.msra.mxu0 0.0
        %1422 = vmatpush.msra.mxu0 0.0
        %1423 = vmatpush.msra.mxu0 0.0
        %1424 = vmatpush.msra.mxu0 0.0
        %1425 = vmatpush.msra.mxu0 0.0
        %1426 = vmatpush.msra.mxu0 0.0
        %1427 = vmatpush.msra.mxu0 0.0
        %1428 = vmatpush.msra.mxu0 0.0
        %1429 = vmatpush.msra.mxu0 0.0
        %1430 = vmatpush.msra.mxu0 0.0
        %1431 = vmatpush.msra.mxu0 0.0
        %1432 = vmatpush.msra.mxu0 0.0
        %1433 = vmatpush.msra.mxu0 0.0
        %1434 = vmatpush.msra.mxu0 0.0
        %1435 = vmatpush.msra.mxu0 %v1416
        %1436 = vmatmul.f32.gmra.mxu0 %v1321
        %v1437 = vpop.f32.mrf.mxu0
        %v1438 = vadd.f32 0.0, %v1437
        %1439 = vmatmul.f32.gmra.mxu0 %v1324
        %v1440 = vpop.f32.mrf.mxu0
        %v1441 = vadd.f32 0.0, %v1440
        %1442 = vmatmul.f32.gmra.mxu0 %v1327
        %v1443 = vpop.f32.mrf.mxu0
        %v1444 = vadd.f32 0.0, %v1443
        %1445 = vmatmul.f32.gmra.mxu0 %v1330
        %v1446 = vpop.f32.mrf.mxu0
        %v1447 = vadd.f32 0.0, %v1446
        %1448 = vmatmul.f32.gmra.mxu0 %v1333
        %v1449 = vpop.f32.mrf.mxu0
        %v1450 = vadd.f32 0.0, %v1449
        %1451 = vmatmul.f32.gmra.mxu0 %v1336
        %v1452 = vpop.f32.mrf.mxu0
        %v1453 = vadd.f32 0.0, %v1452
        %1454 = vmatmul.f32.gmra.mxu0 %v1339
        %v1455 = vpop.f32.mrf.mxu0
        %v1456 = vadd.f32 0.0, %v1455
        %1457 = vmatmul.f32.gmra.mxu0 %v1342
        %v1458 = vpop.f32.mrf.mxu0
        %v1459 = vadd.f32 0.0, %v1458
        %1460 = vmatmul.f32.gmra.mxu0 %v1345
        %v1461 = vpop.f32.mrf.mxu0
        %v1462 = vadd.f32 0.0, %v1461
        %1463 = vmatmul.f32.gmra.mxu0 %v1348
        %v1464 = vpop.f32.mrf.mxu0
        %v1465 = vadd.f32 0.0, %v1464
        %1466 = vmatmul.f32.gmra.mxu0 %v1351
        %v1467 = vpop.f32.mrf.mxu0
        %v1468 = vadd.f32 0.0, %v1467
        %1469 = vmatmul.f32.gmra.mxu0 %v1354
        %v1470 = vpop.f32.mrf.mxu0
        %v1471 = vadd.f32 0.0, %v1470
        %1472 = vmatmul.f32.gmra.mxu0 %v1357
        %v1473 = vpop.f32.mrf.mxu0
        %v1474 = vadd.f32 0.0, %v1473
        %1475 = vmatmul.f32.gmra.mxu0 %v1360
        %v1476 = vpop.f32.mrf.mxu0
        %v1477 = vadd.f32 0.0, %v1476
        %1478 = vmatmul.f32.gmra.mxu0 %v1363
        %v1479 = vpop.f32.mrf.mxu0
        %v1480 = vadd.f32 0.0, %v1479
        %1481 = vmatmul.f32.gmra.mxu0 %v1366
        %v1482 = vpop.f32.mrf.mxu0
        %v1483 = vadd.f32 0.0, %v1482
        %1484 = vmatmul.f32.gmra.mxu0 %v1369
        %v1485 = vpop.f32.mrf.mxu0
        %v1486 = vadd.f32 0.0, %v1485
        %1487 = vmatmul.f32.gmra.mxu0 %v1372
        %v1488 = vpop.f32.mrf.mxu0
        %v1489 = vadd.f32 0.0, %v1488
        %1490 = vmatmul.f32.gmra.mxu0 %v1375
        %v1491 = vpop.f32.mrf.mxu0
        %v1492 = vadd.f32 0.0, %v1491
        %1493 = vmatmul.f32.gmra.mxu0 %v1378
        %v1494 = vpop.f32.mrf.mxu0
        %v1495 = vadd.f32 0.0, %v1494
        %1496 = vmatmul.f32.gmra.mxu0 %v1381
        %v1497 = vpop.f32.mrf.mxu0
        %v1498 = vadd.f32 0.0, %v1497
        %1499 = vmatmul.f32.gmra.mxu0 %v1384
        %v1500 = vpop.f32.mrf.mxu0
        %v1501 = vadd.f32 0.0, %v1500
        %1502 = vmatmul.f32.gmra.mxu0 %v1387
        %v1503 = vpop.f32.mrf.mxu0
        %v1504 = vadd.f32 0.0, %v1503
        %1505 = vmatmul.f32.gmra.mxu0 %v1390
        %v1506 = vpop.f32.mrf.mxu0
        %v1507 = vadd.f32 0.0, %v1506
        %1508 = vmatmul.f32.gmra.mxu0 %v1393
        %v1509 = vpop.f32.mrf.mxu0
        %v1510 = vadd.f32 0.0, %v1509
        %1511 = vmatmul.f32.gmra.mxu0 %v1396
        %v1512 = vpop.f32.mrf.mxu0
        %v1513 = vadd.f32 0.0, %v1512
        %1514 = vmatmul.f32.gmra.mxu0 %v1399
        %v1515 = vpop.f32.mrf.mxu0
        %v1516 = vadd.f32 0.0, %v1515
        %1517 = vmatmul.f32.gmra.mxu0 %v1402
        %v1518 = vpop.f32.mrf.mxu0
        %v1519 = vadd.f32 0.0, %v1518
        %1520 = vmatmul.f32.gmra.mxu0 %v1405
        %v1521 = vpop.f32.mrf.mxu0
        %v1522 = vadd.f32 0.0, %v1521
        %1523 = vmatmul.f32.gmra.mxu0 %v1408
        %v1524 = vpop.f32.mrf.mxu0
        %v1525 = vadd.f32 0.0, %v1524
        %1526 = vmatmul.f32.gmra.mxu0 %v1411
        %v1527 = vpop.f32.mrf.mxu0
        %v1528 = vadd.f32 0.0, %v1527
        %1529 = vmatmul.f32.gmra.mxu0 %v1414
        %v1530 = vpop.f32.mrf.mxu0
        %v1531 = vadd.f32 0.0, %v1530
        %1532 = vdwg.mxu0
        %1533 = vmatpush.msra.mxu0 0.0
        %1534 = vmatpush.msra.mxu0 0.0
        %1535 = vmatpush.msra.mxu0 0.0
        %1536 = vmatpush.msra.mxu0 0.0
        %1537 = vmatpush.msra.mxu0 0.0
        %1538 = vmatpush.msra.mxu0 0.0
        %1539 = vmatpush.msra.mxu0 0.0
        %1540 = vmatpush.msra.mxu0 0.0
        %1541 = vmatpush.msra.mxu0 0.0
        %1542 = vmatpush.msra.mxu0 0.0
        %1543 = vmatpush.msra.mxu0 0.0
        %1544 = vmatpush.msra.mxu0 0.0
        %1545 = vmatpush.msra.mxu0 0.0
        %1546 = vmatpush.msra.mxu0 0.0
        %1547 = vmatpush.msra.mxu0 0.0
        %1548 = vmatpush.msra.mxu0 %v1418
        %1549 = vmatmul.f32.gmra.mxu0 %v1321
        %v1550 = vpop.f32.mrf.mxu0
        %v1551 = vadd.f32 0.0, %v1550
        %1552 = vmatmul.f32.gmra.mxu0 %v1324
        %v1553 = vpop.f32.mrf.mxu0
        %v1554 = vadd.f32 0.0, %v1553
        %1555 = vmatmul.f32.gmra.mxu0 %v1327
        %v1556 = vpop.f32.mrf.mxu0
        %v1557 = vadd.f32 0.0, %v1556
        %1558 = vmatmul.f32.gmra.mxu0 %v1330
        %v1559 = vpop.f32.mrf.mxu0
        %v1560 = vadd.f32 0.0, %v1559
        %1561 = vmatmul.f32.gmra.mxu0 %v1333
        %v1562 = vpop.f32.mrf.mxu0
        %v1563 = vadd.f32 0.0, %v1562
        %1564 = vmatmul.f32.gmra.mxu0 %v1336
        %v1565 = vpop.f32.mrf.mxu0
        %v1566 = vadd.f32 0.0, %v1565
        %1567 = vmatmul.f32.gmra.mxu0 %v1339
        %v1568 = vpop.f32.mrf.mxu0
        %v1569 = vadd.f32 0.0, %v1568
        %1570 = vmatmul.f32.gmra.mxu0 %v1342
        %v1571 = vpop.f32.mrf.mxu0
        %v1572 = vadd.f32 0.0, %v1571
        %1573 = vmatmul.f32.gmra.mxu0 %v1345
        %v1574 = vpop.f32.mrf.mxu0
        %v1575 = vadd.f32 0.0, %v1574
        %1576 = vmatmul.f32.gmra.mxu0 %v1348
        %v1577 = vpop.f32.mrf.mxu0
        %v1578 = vadd.f32 0.0, %v1577
        %1579 = vmatmul.f32.gmra.mxu0 %v1351
        %v1580 = vpop.f32.mrf.mxu0
        %v1581 = vadd.f32 0.0, %v1580
        %1582 = vmatmul.f32.gmra.mxu0 %v1354
        %v1583 = vpop.f32.mrf.mxu0
        %v1584 = vadd.f32 0.0, %v1583
        %1585 = vmatmul.f32.gmra.mxu0 %v1357
        %v1586 = vpop.f32.mrf.mxu0
        %v1587 = vadd.f32 0.0, %v1586
        %1588 = vmatmul.f32.gmra.mxu0 %v1360
        %v1589 = vpop.f32.mrf.mxu0
        %v1590 = vadd.f32 0.0, %v1589
        %1591 = vmatmul.f32.gmra.mxu0 %v1363
        %v1592 = vpop.f32.mrf.mxu0
        %v1593 = vadd.f32 0.0, %v1592
        %1594 = vmatmul.f32.gmra.mxu0 %v1366
        %v1595 = vpop.f32.mrf.mxu0
        %v1596 = vadd.f32 0.0, %v1595
        %1597 = vmatmul.f32.gmra.mxu0 %v1369
        %v1598 = vpop.f32.mrf.mxu0
        %v1599 = vadd.f32 0.0, %v1598
        %1600 = vmatmul.f32.gmra.mxu0 %v1372
        %v1601 = vpop.f32.mrf.mxu0
        %v1602 = vadd.f32 0.0, %v1601
        %1603 = vmatmul.f32.gmra.mxu0 %v1375
        %v1604 = vpop.f32.mrf.mxu0
        %v1605 = vadd.f32 0.0, %v1604
        %1606 = vmatmul.f32.gmra.mxu0 %v1378
        %v1607 = vpop.f32.mrf.mxu0
        %v1608 = vadd.f32 0.0, %v1607
        %1609 = vmatmul.f32.gmra.mxu0 %v1381
        %v1610 = vpop.f32.mrf.mxu0
        %v1611 = vadd.f32 0.0, %v1610
        %1612 = vmatmul.f32.gmra.mxu0 %v1384
        %v1613 = vpop.f32.mrf.mxu0
        %v1614 = vadd.f32 0.0, %v1613
        %1615 = vmatmul.f32.gmra.mxu0 %v1387
        %v1616 = vpop.f32.mrf.mxu0
        %v1617 = vadd.f32 0.0, %v1616
        %1618 = vmatmul.f32.gmra.mxu0 %v1390
        %v1619 = vpop.f32.mrf.mxu0
        %v1620 = vadd.f32 0.0, %v1619
        %1621 = vmatmul.f32.gmra.mxu0 %v1393
        %v1622 = vpop.f32.mrf.mxu0
        %v1623 = vadd.f32 0.0, %v1622
        %1624 = vmatmul.f32.gmra.mxu0 %v1396
        %v1625 = vpop.f32.mrf.mxu0
        %v1626 = vadd.f32 0.0, %v1625
        %1627 = vmatmul.f32.gmra.mxu0 %v1399
        %v1628 = vpop.f32.mrf.mxu0
        %v1629 = vadd.f32 0.0, %v1628
        %1630 = vmatmul.f32.gmra.mxu0 %v1402
        %v1631 = vpop.f32.mrf.mxu0
        %v1632 = vadd.f32 0.0, %v1631
        %1633 = vmatmul.f32.gmra.mxu0 %v1405
        %v1634 = vpop.f32.mrf.mxu0
        %v1635 = vadd.f32 0.0, %v1634
        %1636 = vmatmul.f32.gmra.mxu0 %v1408
        %v1637 = vpop.f32.mrf.mxu0
        %v1638 = vadd.f32 0.0, %v1637
        %1639 = vmatmul.f32.gmra.mxu0 %v1411
        %v1640 = vpop.f32.mrf.mxu0
        %v1641 = vadd.f32 0.0, %v1640
        %1642 = vmatmul.f32.gmra.mxu0 %v1414
        %v1643 = vpop.f32.mrf.mxu0
        %v1644 = vadd.f32 0.0, %v1643
        %1645 = vdwg.mxu0
        %v1646 = vmax.f32 %v1438, %v1444
        %v1647 = vmax.f32 %v1441, %v1447
        %v1648 = vmax.f32 %v1646, %v1450
        %v1649 = vmax.f32 %v1647, %v1453
        %v1650 = vmax.f32 %v1648, %v1456
        %v1651 = vmax.f32 %v1649, %v1459
        %v1652 = vmax.f32 %v1650, %v1462
        %v1653 = vmax.f32 %v1651, %v1465
        %v1654 = vmax.f32 %v1652, %v1468
        %v1655 = vmax.f32 %v1653, %v1471
        %v1656 = vmax.f32 %v1654, %v1474
        %v1657 = vmax.f32 %v1655, %v1477
        %v1658 = vmax.f32 %v1656, %v1480
        %v1659 = vmax.f32 %v1657, %v1483
        %v1660 = vmax.f32 %v1658, %v1486
        %v1661 = vmax.f32 %v1659, %v1489
        %v1662 = vmax.f32 %v1660, %v1492
        %v1663 = vmax.f32 %v1661, %v1495
        %v1664 = vmax.f32 %v1662, %v1498
        %v1665 = vmax.f32 %v1663, %v1501
        %v1666 = vmax.f32 %v1664, %v1504
        %v1667 = vmax.f32 %v1665, %v1507
        %v1668 = vmax.f32 %v1666, %v1510
        %v1669 = vmax.f32 %v1667, %v1513
        %v1670 = vmax.f32 %v1668, %v1516
        %v1671 = vmax.f32 %v1669, %v1519
        %v1672 = vmax.f32 %v1670, %v1522
        %v1673 = vmax.f32 %v1671, %v1525
        %v1674 = vmax.f32 %v1672, %v1528
        %v1675 = vmax.f32 %v1673, %v1531
        %v1676 = vmax.f32 %v1674, %v1675
        %v1677 = vrot.slane %v1676, 4
        %v1678 = vmax.f32 %v1676, %v1677
        %v1679 = vrot.slane %v1678, 2
        %v1680 = vmax.f32 %v1678, %v1679
        %v1681 = vrot.slane %v1680, 1
        %v1682 = vmax.f32 %v1680, %v1681
        %v1683 = vmax.f32 %v1551, %v1557
        %v1684 = vmax.f32 %v1554, %v1560
        %v1685 = vmax.f32 %v1683, %v1563
        %v1686 = vmax.f32 %v1684, %v1566
        %v1687 = vmax.f32 %v1685, %v1569
        %v1688 = vmax.f32 %v1686, %v1572
        %v1689 = vmax.f32 %v1687, %v1575
        %v1690 = vmax.f32 %v1688, %v1578
        %v1691 = vmax.f32 %v1689, %v1581
        %v1692 = vmax.f32 %v1690, %v1584
        %v1693 = vmax.f32 %v1691, %v1587
        %v1694 = vmax.f32 %v1692, %v1590
        %v1695 = vmax.f32 %v1693, %v1593
        %v1696 = vmax.f32 %v1694, %v1596
        %v1697 = vmax.f32 %v1695, %v1599
        %v1698 = vmax.f32 %v1696, %v1602
        %v1699 = vmax.f32 %v1697, %v1605
        %v1700 = vmax.f32 %v1698, %v1608
        %v1701 = vmax.f32 %v1699, %v1611
        %v1702 = vmax.f32 %v1700, %v1614
        %v1703 = vmax.f32 %v1701, %v1617
        %v1704 = vmax.f32 %v1702, %v1620
        %v1705 = vmax.f32 %v1703, %v1623
        %v1706 = vmax.f32 %v1704, %v1626
        %v1707 = vmax.f32 %v1705, %v1629
        %v1708 = vmax.f32 %v1706, %v1632
        %v1709 = vmax.f32 %v1707, %v1635
        %v1710 = vmax.f32 %v1708, %v1638
        %v1711 = vmax.f32 %v1709, %v1641
        %v1712 = vmax.f32 %v1710, %v1644
        %v1713 = vmax.f32 %v1711, %v1712
        %v1714 = vrot.slane %v1713, 4
        %v1715 = vmax.f32 %v1713, %v1714
        %v1716 = vrot.slane %v1715, 2
        %v1717 = vmax.f32 %v1715, %v1716
        %v1718 = vrot.slane %v1717, 1
        %v1719 = vmax.f32 %v1717, %v1718
        %v1720 = vsub.f32 %v1438, %v1682
        %v1721 = vsub.f32 %v1551, %v1719
        %v1722 = vsub.f32 %v1441, %v1682
        %v1723 = vsub.f32 %v1554, %v1719
        %v1724 = vsub.f32 %v1444, %v1682
        %v1725 = vsub.f32 %v1557, %v1719
        %v1726 = vsub.f32 %v1447, %v1682
        %v1727 = vsub.f32 %v1560, %v1719
        %v1728 = vsub.f32 %v1450, %v1682
        %v1729 = vsub.f32 %v1563, %v1719
        %v1730 = vsub.f32 %v1453, %v1682
        %v1731 = vsub.f32 %v1566, %v1719
        %v1732 = vsub.f32 %v1456, %v1682
        %v1733 = vsub.f32 %v1569, %v1719
        %v1734 = vsub.f32 %v1459, %v1682
        %v1735 = vsub.f32 %v1572, %v1719
        %v1736 = vsub.f32 %v1462, %v1682
        %v1737 = vsub.f32 %v1575, %v1719
        %v1738 = vsub.f32 %v1465, %v1682
        %v1739 = vsub.f32 %v1578, %v1719
        %v1740 = vsub.f32 %v1468, %v1682
        %v1741 = vsub.f32 %v1581, %v1719
        %v1742 = vsub.f32 %v1471, %v1682
        %v1743 = vsub.f32 %v1584, %v1719
        %v1744 = vsub.f32 %v1474, %v1682
        %v1745 = vsub.f32 %v1587, %v1719
        %v1746 = vsub.f32 %v1477, %v1682
        %v1747 = vsub.f32 %v1590, %v1719
        %v1748 = vsub.f32 %v1480, %v1682
        %v1749 = vsub.f32 %v1593, %v1719
        %v1750 = vsub.f32 %v1483, %v1682
        %v1751 = vsub.f32 %v1596, %v1719
        %v1752 = vsub.f32 %v1486, %v1682
        %v1753 = vsub.f32 %v1599, %v1719
        %v1754 = vsub.f32 %v1489, %v1682
        %v1755 = vsub.f32 %v1602, %v1719
        %v1756 = vsub.f32 %v1492, %v1682
        %v1757 = vsub.f32 %v1605, %v1719
        %v1758 = vsub.f32 %v1495, %v1682
        %v1759 = vsub.f32 %v1608, %v1719
        %v1760 = vsub.f32 %v1498, %v1682
        %v1761 = vsub.f32 %v1611, %v1719
        %v1762 = vsub.f32 %v1501, %v1682
        %v1763 = vsub.f32 %v1614, %v1719
        %v1764 = vsub.f32 %v1504, %v1682
        %v1765 = vsub.f32 %v1617, %v1719
        %v1766 = vsub.f32 %v1507, %v1682
        %v1767 = vsub.f32 %v1620, %v1719
        %v1768 = vsub.f32 %v1510, %v1682
        %v1769 = vsub.f32 %v1623, %v1719
        %v1770 = vsub.f32 %v1513, %v1682
        %v1771 = vsub.f32 %v1626, %v1719
        %v1772 = vsub.f32 %v1516, %v1682
        %v1773 = vsub.f32 %v1629, %v1719
        %v1774 = vsub.f32 %v1519, %v1682
        %v1775 = vsub.f32 %v1632, %v1719
        %v1776 = vsub.f32 %v1522, %v1682
        %v1777 = vsub.f32 %v1635, %v1719
        %v1778 = vsub.f32 %v1525, %v1682
        %v1779 = vsub.f32 %v1638, %v1719
        %v1780 = vsub.f32 %v1528, %v1682
        %v1781 = vsub.f32 %v1641, %v1719
        %v1782 = vsub.f32 %v1531, %v1682
        %v1783 = vsub.f32 %v1644, %v1719
        %v1784 = vmul.f32 %v1720, 1.442695
        %v1785 = vpow.pop %v1784
        %v1786 = vmul.f32 %v1721, 1.442695
        %v1787 = vpow.pop %v1786
        %v1788 = vmul.f32 %v1722, 1.442695
        %v1789 = vpow.pop %v1788
        %v1790 = vmul.f32 %v1723, 1.442695
        %v1791 = vpow.pop %v1790
        %v1792 = vmul.f32 %v1724, 1.442695
        %v1793 = vpow.pop %v1792
        %v1794 = vmul.f32 %v1725, 1.442695
        %v1795 = vpow.pop %v1794
        %v1796 = vmul.f32 %v1726, 1.442695
        %v1797 = vpow.pop %v1796
        %v1798 = vmul.f32 %v1727, 1.442695
        %v1799 = vpow.pop %v1798
        %v1800 = vmul.f32 %v1728, 1.442695
        %v1801 = vpow.pop %v1800
        %v1802 = vmul.f32 %v1729, 1.442695
        %v1803 = vpow.pop %v1802
        %v1804 = vmul.f32 %v1730, 1.442695
        %v1805 = vpow.pop %v1804
        %v1806 = vmul.f32 %v1731, 1.442695
        %v1807 = vpow.pop %v1806
        %v1808 = vmul.f32 %v1732, 1.442695
        %v1809 = vpow.pop %v1808
        %v1810 = vmul.f32 %v1733, 1.442695
        %v1811 = vpow.pop %v1810
        %v1812 = vmul.f32 %v1734, 1.442695
        %v1813 = vpow.pop %v1812
        %v1814 = vmul.f32 %v1735, 1.442695
        %v1815 = vpow.pop %v1814
        %v1816 = vmul.f32 %v1736, 1.442695
        %v1817 = vpow.pop %v1816
        %v1818 = vmul.f32 %v1737, 1.442695
        %v1819 = vpow.pop %v1818
        %v1820 = vmul.f32 %v1738, 1.442695
        %v1821 = vpow.pop %v1820
        %v1822 = vmul.f32 %v1739, 1.442695
        %v1823 = vpow.pop %v1822
        %v1824 = vmul.f32 %v1740, 1.442695
        %v1825 = vpow.pop %v1824
        %v1826 = vmul.f32 %v1741, 1.442695
        %v1827 = vpow.pop %v1826
        %v1828 = vmul.f32 %v1742, 1.442695
        %v1829 = vpow.pop %v1828
        %v1830 = vmul.f32 %v1743, 1.442695
        %v1831 = vpow.pop %v1830
        %v1832 = vmul.f32 %v1744, 1.442695
        %v1833 = vpow.pop %v1832
        %v1834 = vmul.f32 %v1745, 1.442695
        %v1835 = vpow.pop %v1834
        %v1836 = vmul.f32 %v1746, 1.442695
        %v1837 = vpow.pop %v1836
        %v1838 = vmul.f32 %v1747, 1.442695
        %v1839 = vpow.pop %v1838
        %v1840 = vmul.f32 %v1748, 1.442695
        %v1841 = vpow.pop %v1840
        %v1842 = vmul.f32 %v1749, 1.442695
        %v1843 = vpow.pop %v1842
        %v1844 = vmul.f32 %v1750, 1.442695
        %v1845 = vpow.pop %v1844
        %v1846 = vmul.f32 %v1751, 1.442695
        %v1847 = vpow.pop %v1846
        %v1848 = vmul.f32 %v1752, 1.442695
        %v1849 = vpow.pop %v1848
        %v1850 = vmul.f32 %v1753, 1.442695
        %v1851 = vpow.pop %v1850
        %v1852 = vmul.f32 %v1754, 1.442695
        %v1853 = vpow.pop %v1852
        %v1854 = vmul.f32 %v1755, 1.442695
        %v1855 = vpow.pop %v1854
        %v1856 = vmul.f32 %v1756, 1.442695
        %v1857 = vpow.pop %v1856
        %v1858 = vmul.f32 %v1757, 1.442695
        %v1859 = vpow.pop %v1858
        %v1860 = vmul.f32 %v1758, 1.442695
        %v1861 = vpow.pop %v1860
        %v1862 = vmul.f32 %v1759, 1.442695
        %v1863 = vpow.pop %v1862
        %v1864 = vmul.f32 %v1760, 1.442695
        %v1865 = vpow.pop %v1864
        %v1866 = vmul.f32 %v1761, 1.442695
        %v1867 = vpow.pop %v1866
        %v1868 = vmul.f32 %v1762, 1.442695
        %v1869 = vpow.pop %v1868
        %v1870 = vmul.f32 %v1763, 1.442695
        %v1871 = vpow.pop %v1870
        %v1872 = vmul.f32 %v1764, 1.442695
        %v1873 = vpow.pop %v1872
        %v1874 = vmul.f32 %v1765, 1.442695
        %v1875 = vpow.pop %v1874
        %v1876 = vmul.f32 %v1766, 1.442695
        %v1877 = vpow.pop %v1876
        %v1878 = vmul.f32 %v1767, 1.442695
        %v1879 = vpow.pop %v1878
        %v1880 = vmul.f32 %v1768, 1.442695
        %v1881 = vpow.pop %v1880
        %v1882 = vmul.f32 %v1769, 1.442695
        %v1883 = vpow.pop %v1882
        %v1884 = vmul.f32 %v1770, 1.442695
        %v1885 = vpow.pop %v1884
        %v1886 = vmul.f32 %v1771, 1.442695
        %v1887 = vpow.pop %v1886
        %v1888 = vmul.f32 %v1772, 1.442695
        %v1889 = vpow.pop %v1888
        %v1890 = vmul.f32 %v1773, 1.442695
        %v1891 = vpow.pop %v1890
        %v1892 = vmul.f32 %v1774, 1.442695
        %v1893 = vpow.pop %v1892
        %v1894 = vmul.f32 %v1775, 1.442695
        %v1895 = vpow.pop %v1894
        %v1896 = vmul.f32 %v1776, 1.442695
        %v1897 = vpow.pop %v1896
        %v1898 = vmul.f32 %v1777, 1.442695
        %v1899 = vpow.pop %v1898
        %v1900 = vmul.f32 %v1778, 1.442695
        %v1901 = vpow.pop %v1900
        %v1902 = vmul.f32 %v1779, 1.442695
        %v1903 = vpow.pop %v1902
        %v1904 = vmul.f32 %v1780, 1.442695
        %v1905 = vpow.pop %v1904
        %v1906 = vmul.f32 %v1781, 1.442695
        %v1907 = vpow.pop %v1906
        %v1908 = vmul.f32 %v1782, 1.442695
        %v1909 = vpow.pop %v1908
        %v1910 = vmul.f32 %v1783, 1.442695
        %v1911 = vpow.pop %v1910
        %v1912 = vadd.f32 %v1785, %v1789
        %v1913 = vadd.f32 %v1912, %v1793
        %v1914 = vadd.f32 %v1913, %v1797
        %v1915 = vadd.f32 %v1914, %v1801
        %v1916 = vadd.f32 %v1915, %v1805
        %v1917 = vadd.f32 %v1916, %v1809
        %v1918 = vadd.f32 %v1917, %v1813
        %v1919 = vadd.f32 %v1918, %v1817
        %v1920 = vadd.f32 %v1919, %v1821
        %v1921 = vadd.f32 %v1920, %v1825
        %v1922 = vadd.f32 %v1921, %v1829
        %v1923 = vadd.f32 %v1922, %v1833
        %v1924 = vadd.f32 %v1923, %v1837
        %v1925 = vadd.f32 %v1924, %v1841
        %v1926 = vadd.f32 %v1925, %v1845
        %v1927 = vadd.f32 %v1926, %v1849
        %v1928 = vadd.f32 %v1927, %v1853
        %v1929 = vadd.f32 %v1928, %v1857
        %v1930 = vadd.f32 %v1929, %v1861
        %v1931 = vadd.f32 %v1930, %v1865
        %v1932 = vadd.f32 %v1931, %v1869
        %v1933 = vadd.f32 %v1932, %v1873
        %v1934 = vadd.f32 %v1933, %v1877
        %v1935 = vadd.f32 %v1934, %v1881
        %v1936 = vadd.f32 %v1935, %v1885
        %v1937 = vadd.f32 %v1936, %v1889
        %v1938 = vadd.f32 %v1937, %v1893
        %v1939 = vadd.f32 %v1938, %v1897
        %v1940 = vadd.f32 %v1939, %v1901
        %v1941 = vadd.f32 %v1940, %v1905
        %v1942 = vadd.f32 %v1941, %v1909
        %v1943 = vrot.slane %v1942, 4
        %v1944 = vadd.f32 %v1942, %v1943
        %v1945 = vrot.slane %v1944, 2
        %v1946 = vadd.f32 %v1944, %v1945
        %v1947 = vrot.slane %v1946, 1
        %v1948 = vadd.f32 %v1946, %v1947
        %v1949 = vadd.f32 %v1787, %v1791
        %v1950 = vadd.f32 %v1949, %v1795
        %v1951 = vadd.f32 %v1950, %v1799
        %v1952 = vadd.f32 %v1951, %v1803
        %v1953 = vadd.f32 %v1952, %v1807
        %v1954 = vadd.f32 %v1953, %v1811
        %v1955 = vadd.f32 %v1954, %v1815
        %v1956 = vadd.f32 %v1955, %v1819
        %v1957 = vadd.f32 %v1956, %v1823
        %v1958 = vadd.f32 %v1957, %v1827
        %v1959 = vadd.f32 %v1958, %v1831
        %v1960 = vadd.f32 %v1959, %v1835
        %v1961 = vadd.f32 %v1960, %v1839
        %v1962 = vadd.f32 %v1961, %v1843
        %v1963 = vadd.f32 %v1962, %v1847
        %v1964 = vadd.f32 %v1963, %v1851
        %v1965 = vadd.f32 %v1964, %v1855
        %v1966 = vadd.f32 %v1965, %v1859
        %v1967 = vadd.f32 %v1966, %v1863
        %v1968 = vadd.f32 %v1967, %v1867
        %v1969 = vadd.f32 %v1968, %v1871
        %v1970 = vadd.f32 %v1969, %v1875
        %v1971 = vadd.f32 %v1970, %v1879
        %v1972 = vadd.f32 %v1971, %v1883
        %v1973 = vadd.f32 %v1972, %v1887
        %v1974 = vadd.f32 %v1973, %v1891
        %v1975 = vadd.f32 %v1974, %v1895
        %v1976 = vadd.f32 %v1975, %v1899
        %v1977 = vadd.f32 %v1976, %v1903
        %v1978 = vadd.f32 %v1977, %v1907
        %v1979 = vadd.f32 %v1978, %v1911
        %v1980 = vrot.slane %v1979, 4
        %v1981 = vadd.f32 %v1979, %v1980
        %v1982 = vrot.slane %v1981, 2
        %v1983 = vadd.f32 %v1981, %v1982
        %v1984 = vrot.slane %v1983, 1
        %v1985 = vadd.f32 %v1983, %v1984
        %v1988 = vrot.slane %v1244, 4
        %v1989 = vrot.slane %v1245, 4
        %1992 = vmatpush.msra.mxu0 %v1845
        %1993 = vmatpush.msra.mxu0 %v1841
        %1994 = vmatpush.msra.mxu0 %v1837
        %1995 = vmatpush.msra.mxu0 %v1833
        %1996 = vmatpush.msra.mxu0 %v1829
        %1997 = vmatpush.msra.mxu0 %v1825
        %1998 = vmatpush.msra.mxu0 %v1821
        %1999 = vmatpush.msra.mxu0 %v1817
        %2000 = vmatpush.msra.mxu0 %v1813
        %2001 = vmatpush.msra.mxu0 %v1809
        %2002 = vmatpush.msra.mxu0 %v1805
        %2003 = vmatpush.msra.mxu0 %v1801
        %2004 = vmatpush.msra.mxu0 %v1797
        %2005 = vmatpush.msra.mxu0 %v1793
        %2006 = vmatpush.msra.mxu0 %v1789
        %2007 = vmatpush.msra.mxu0 %v1785
        %2008 = vmatmul.f32.gmra.mxu0 %v1988
        %v2009 = vpop.f32.mrf.mxu0
        %v2010 = vadd.f32 0.0, %v2009
        %2011 = vdwg.mxu0
        %2012 = vmatpush.msra.mxu0 %v1909
        %2013 = vmatpush.msra.mxu0 %v1905
        %2014 = vmatpush.msra.mxu0 %v1901
        %2015 = vmatpush.msra.mxu0 %v1897
        %2016 = vmatpush.msra.mxu0 %v1893
        %2017 = vmatpush.msra.mxu0 %v1889
        %2018 = vmatpush.msra.mxu0 %v1885
        %2019 = vmatpush.msra.mxu0 %v1881
        %2020 = vmatpush.msra.mxu0 %v1877
        %2021 = vmatpush.msra.mxu0 %v1873
        %2022 = vmatpush.msra.mxu0 %v1869
        %2023 = vmatpush.msra.mxu0 %v1865
        %2024 = vmatpush.msra.mxu0 %v1861
        %2025 = vmatpush.msra.mxu0 %v1857
        %2026 = vmatpush.msra.mxu0 %v1853
        %2027 = vmatpush.msra.mxu0 %v1849
        %2028 = vmatmul.f32.gmra.mxu0 %v1989
        %v2029 = vpop.f32.mrf.mxu0
        %v2030 = vadd.f32 %v2010, %v2029
        %2031 = vdwg.mxu0
        %2032 = vmatpush.msra.mxu0 %v1847
        %2033 = vmatpush.msra.mxu0 %v1843
        %2034 = vmatpush.msra.mxu0 %v1839
        %2035 = vmatpush.msra.mxu0 %v1835
        %2036 = vmatpush.msra.mxu0 %v1831
        %2037 = vmatpush.msra.mxu0 %v1827
        %2038 = vmatpush.msra.mxu0 %v1823
        %2039 = vmatpush.msra.mxu0 %v1819
        %2040 = vmatpush.msra.mxu0 %v1815
        %2041 = vmatpush.msra.mxu0 %v1811
        %2042 = vmatpush.msra.mxu0 %v1807
        %2043 = vmatpush.msra.mxu0 %v1803
        %2044 = vmatpush.msra.mxu0 %v1799
        %2045 = vmatpush.msra.mxu0 %v1795
        %2046 = vmatpush.msra.mxu0 %v1791
        %2047 = vmatpush.msra.mxu0 %v1787
        %2048 = vmatmul.f32.gmra.mxu0 %v1988
        %v2049 = vpop.f32.mrf.mxu0
        %v2050 = vadd.f32 0.0, %v2049
        %2051 = vdwg.mxu0
        %2052 = vmatpush.msra.mxu0 %v1911
        %2053 = vmatpush.msra.mxu0 %v1907
        %2054 = vmatpush.msra.mxu0 %v1903
        %2055 = vmatpush.msra.mxu0 %v1899
        %2056 = vmatpush.msra.mxu0 %v1895
        %2057 = vmatpush.msra.mxu0 %v1891
        %2058 = vmatpush.msra.mxu0 %v1887
        %2059 = vmatpush.msra.mxu0 %v1883
        %2060 = vmatpush.msra.mxu0 %v1879
        %2061 = vmatpush.msra.mxu0 %v1875
        %2062 = vmatpush.msra.mxu0 %v1871
        %2063 = vmatpush.msra.mxu0 %v1867
        %2064 = vmatpush.msra.mxu0 %v1863
        %2065 = vmatpush.msra.mxu0 %v1859
        %2066 = vmatpush.msra.mxu0 %v1855
        %2067 = vmatpush.msra.mxu0 %v1851
        %2068 = vmatmul.f32.gmra.mxu0 %v1989
        %v2069 = vpop.f32.mrf.mxu0
        %v2070 = vadd.f32 %v2050, %v2069
        %2071 = vdwg.mxu0
        %v2072 = vrcp.pop %v1948
        %v2073 = vrcp.pop %v1985
        %v2074 = vmul.f32 %v2030, %v2072
        %v2075 = vmul.f32 %v2070, %v2073
        %v2078 = vrot.slane %v2074, 4
        %v2079 = vrot.slane %v2075, 4
        %v2082 = vsel %vm581, %v1236, %v2078
        %v2083 = vsel %vm581, %v1237, %v2079
        %s2084 = smul.addr %s408, 8
        %s2085 = scalar_lea.vmem %s290, %s2084
        %v2086 = vld [vmem:[%s2085] sm:$0xff]
        %v2087 = vld [vmem:[%s2085 + $0x8] sm:$0xff]
        %v2088 = vld [vmem:[%s5] sm:$0xff]
        %2090 = vset.pattern.permute.xlu0 0
        %2091 = vperm.xlu0 %2090, %v2088
        %v2092 = vpop.permute.xlu0 %2091
        %v2094 = vmul.f32 %v2086, %v2092
        %v2095 = vmul.f32 %v2087, %v2092
        %v2096 = vld [vmem:[%s6] sm:$0xff]
        %2098 = vset.pattern.permute.xlu0 0
        %2099 = vperm.xlu0 %2098, %v2096
        %v2100 = vpop.permute.xlu0 %2099
        %v2102 = vadd.f32 %v2094, %v2100
        %v2103 = vadd.f32 %v2095, %v2100
        %v2104 = vmax.f32 %v2102, 0.0
        %v2105 = vmax.f32 %v2103, 0.0
        %v2106 = vmin.f32 %v2104, 6.0
        %v2107 = vmin.f32 %v2105, 6.0
        %v2108 = vld [vmem:[%s3] sm:$0xff]
        %v2109 = vld [vmem:[%s4] sm:$0xff]
        %2111 = vset.pattern.permute.xlu0 0
        %2112 = vperm.xlu0 %2111, %v2109
        %v2113 = vpop.permute.xlu0 %2112
        %vm2115 = vcmask 64512
        %v2117 = vsel %vm2115, %v2108, 0
        %2119 = vmatpush.msra.mxu0 0.0
        %2120 = vmatpush.msra.mxu0 0.0
        %2121 = vmatpush.msra.mxu0 0.0
        %2122 = vmatpush.msra.mxu0 0.0
        %2123 = vmatpush.msra.mxu0 0.0
        %2124 = vmatpush.msra.mxu0 0.0
        %2125 = vmatpush.msra.mxu0 0.0
        %2126 = vmatpush.msra.mxu0 0.0
        %2127 = vmatpush.msra.mxu0 0.0
        %2128 = vmatpush.msra.mxu0 0.0
        %2129 = vmatpush.msra.mxu0 0.0
        %2130 = vmatpush.msra.mxu0 0.0
        %2131 = vmatpush.msra.mxu0 0.0
        %2132 = vmatpush.msra.mxu0 0.0
        %2133 = vmatpush.msra.mxu0 0.0
        %2134 = vmatpush.msra.mxu0 %v2082
        %2135 = vmatmul.f32.gmra.mxu0 %v2117
        %v2136 = vpop.f32.mrf.mxu0
        %v2137 = vadd.f32 %v2113, %v2136
        %2138 = vdwg.mxu0
        %2139 = vmatpush.msra.mxu0 0.0
        %2140 = vmatpush.msra.mxu0 0.0
        %2141 = vmatpush.msra.mxu0 0.0
        %2142 = vmatpush.msra.mxu0 0.0
        %2143 = vmatpush.msra.mxu0 0.0
        %2144 = vmatpush.msra.mxu0 0.0
        %2145 = vmatpush.msra.mxu0 0.0
        %2146 = vmatpush.msra.mxu0 0.0
        %2147 = vmatpush.msra.mxu0 0.0
        %2148 = vmatpush.msra.mxu0 0.0
        %2149 = vmatpush.msra.mxu0 0.0
        %2150 = vmatpush.msra.mxu0 0.0
        %2151 = vmatpush.msra.mxu0 0.0
        %2152 = vmatpush.msra.mxu0 0.0
        %2153 = vmatpush.msra.mxu0 0.0
        %2154 = vmatpush.msra.mxu0 %v2083
        %2155 = vmatmul.f32.gmra.mxu0 %v2117
        %v2156 = vpop.f32.mrf.mxu0
        %v2157 = vadd.f32 %v2113, %v2156
        %2158 = vdwg.mxu0
        %v2159 = vadd.f32 %v2137, %v2106
        %v2160 = vadd.f32 %v2157, %v2107
        %2161 = vst [vmem:[%s285] sm:$0xff] %v2159
        %2162 = vst [vmem:[%s285 + $0x8] sm:$0xff] %v2160
        %s2163 = sand.u32 %s195, 1
        %s2164 = scalar_lea.sflag [#allocation4], %s2163
        %s2165 = sand.u32 %s195, 1
        %s2166 = smul.addr %s2165, 16
        %s2167 = scalar_lea.vmem [#allocation3], %s2166
        // Predicated region
        $region53: #{tpu_custom_call.1} parent=47 // pred_check
          %p2168 = pneg %p205
        $region54: #{tpu_custom_call.1} parent=47 // pred_check_branch
          %2170 = sbr.rel (%p2168) target = $region56
        $region55: #{tpu_custom_call.1} parent=47 // pred_region
          %s2171 = smul.u32 2, %s26
          %2173 = vsyncadd %s2164, 0
          %s2174 = smul.addr %s25, 2
          %s2175 = sadd.s32 %s2171, %s2174
          %s2176 = smul.addr %s2175, 8
          %s2177 = scalar_lea.hbm %s7, %s2176
          %s2179 = sshll.u32 %s2167, 4
          %s2180 = int_to_ptr.vmem [resolvable:$true] %s2179
          %s2181 = sshll.u32 %s2177, 4
          %s2182 = int_to_ptr.hbm [resolvable:$true] %s2181
          %2184 = dma.vmem_to_hbm [thread:$0]  %s2180, 256, %s2182, %s2164
        $region56: #{tpu_custom_call.1} parent=47 // pred_fallthru
          _
      $region48: #{tpu_custom_call.1} parent=5 // pred_fallthru
        _
      %p2185 = scmp.le.s32.totalorder 2, %s16
      // Predicated region
      $region57: #{tpu_custom_call.1} parent=5 // pred_check
        %p2186 = pneg %p2185
      $region58: #{tpu_custom_call.1} parent=5 // pred_check_branch
        %2188 = sbr.rel (%p2186) target = $region60
      $region59: #{tpu_custom_call.1} parent=5 // pred_region
        %s2189 = ssub.s32 %s16, 2
        // Predicated region
        $region61: #{tpu_custom_call.1} parent=59 // pred_check
          %p2190 = pneg %p211
        $region62: #{tpu_custom_call.1} parent=59 // pred_check_branch
          %2192 = sbr.rel (%p2190) target = $region64
        $region63: #{tpu_custom_call.1} parent=59 // pred_region
          %s2193 = sand.u32 %s196, 1
          %s2194 = scalar_lea.sflag [#allocation4], %s2193
          %s2195 = sand.u32 %s196, 1
          %s2196 = smul.addr %s2195, 16
          %s2197 = scalar_lea.vmem [#allocation3], %s2196
          %2199 = dma.done %s2194, 256
        $region64: #{tpu_custom_call.1} parent=59 // pred_fallthru
          _
      $region60: #{tpu_custom_call.1} parent=5 // pred_fallthru
        _
    $region6: #{tpu_custom_call.1} parent=1 // loop_footer
      %s20 = sadd.s32 1, %s16
    $region7: #{tpu_custom_call.1} parent=1 // loop_footer_branch
      %15 = sbr.rel target = $region3
    $region8: #{tpu_custom_call.1} parent=1 // loop_exit
      _
    %2200 = vsyncpa [#allocation4], 1
    %s2201 = scalar_lea.sflag [#allocation4], 1
    %2202 = vsyncpa %s2201, 1

</llo_original>
